<compile_context>
chip_gen: v6e
topology: v6e:2x2x1
jax: 0.10.0
libtpu: 0.0.40
codegen_flags: <defaults>
</compile_context>

<pallas_src>
import functools

import jax
import jax.numpy as jnp
from jax.experimental import pallas as pl
from jax.experimental.pallas import tpu as pltpu

KH = KW = 7          # kernel_size = 7
PAD = (KH - 1) // 2  # padding = 3


def spatial_attention_kernel(w_ref, m_ref, x_ref, o_ref, *, H, W):
    # w_ref: (2*KH*KW,) f32 SMEM.  [0:49]  = max-pool channel taps (row-major),
    #                              [49:98] = avg-pool channel taps, pre-scaled 1/C.
    # m_ref: (2*KH, H*W) f32 VMEM. rows 0..6  = row-validity masks (dh=-3..3),
    #                              rows 7..13 = col-validity masks (dw=-3..3).
    # x_ref: (Bblk, C, H*W) input block (lane-dense flattened spatial axis).
    # o_ref: (Bblk, C, H*W) output block (x * attention).
    HW = H * W
    xv = x_ref[...]                                       # keep input dtype

    # Channel-wise pooling (torch.max / torch.mean over dim=1).  The 1/C of the
    # mean is folded into the avg-channel weights, so a plain f32 sum suffices.
    pooled_max = jnp.max(xv, axis=1).astype(jnp.float32)         # (Bblk, HW)
    pooled_sum = jnp.sum(xv, axis=1, dtype=jnp.float32)          # (Bblk, HW)

    # Hoist the 98 weight scalars (SMEM -> sregs) out of the tap loops.
    wmax = [[w_ref[r * KW + c] for c in range(KW)] for r in range(KH)]
    wsum = [[w_ref[KH * KW + r * KW + c] for c in range(KW)] for r in range(KH)]

    # --- Separable zero-padded 7x7 cross-correlation ------------------------
    # conv[p] = sum_dw col_ok(dw)[p] *
    #           roll( sum_dh w[dh,dw] * row_ok(dh) * roll(pooled, -dh*W), -dw )[p]
    # (valid because when col_ok(dw)[p] holds, p and p+dw share a row, so the
    #  row mask commutes with the column roll).

    # Row stage: 7 row-shifted, row-masked maps per pooled channel (12 rolls).
    rm, rs = [], []
    for r, dh in enumerate(range(-PAD, PAD + 1)):
        shift = (-(dh * W)) % HW
        pm = pooled_max if shift == 0 else pltpu.roll(pooled_max, shift=shift, axis=1)
        ps = pooled_sum if shift == 0 else pltpu.roll(pooled_sum, shift=shift, axis=1)
        rmask = m_ref[r:r + 1, :]                                # (1, HW)
        rm.append(pm * rmask)
        rs.append(ps * rmask)

    # Column stage: per dw combine the 7 dh taps of both channels, then one
    # roll + one col mask + one accumulate (6 rolls, 7 accumulation passes).
    conv = None
    for c, dw in enumerate(range(-PAD, PAD + 1)):
        col = wmax[0][c] * rm[0] + wsum[0][c] * rs[0]
        for r in range(1, KH):
            col = col + wmax[r][c] * rm[r] + wsum[r][c] * rs[r]
        shift = (-dw) % HW
        if shift:
            col = pltpu.roll(col, shift=shift, axis=1)
        cmask = m_ref[KH + c:KH + c + 1, :]                      # (1, HW)
        contrib = col * cmask
        conv = contrib if conv is None else conv + contrib

    attention = jax.nn.sigmoid(conv)                             # (Bblk, HW) f32

    # Lane-dense store of x * attention (broadcast over channels), in x dtype.
    o_ref[...] = (xv * attention[:, None, :].astype(xv.dtype)).astype(o_ref.dtype)


def spatial_attention(x, w, *, vmem_block_budget_bytes=None):
    """x: (B, C, H, W); w: (2, KH, KW) = Conv2d(2, 1, 7, bias=False) weight with
    the out-channel squeezed."""
    B, C, H, W = x.shape
    HW = H * W
    isz = jnp.dtype(x.dtype).itemsize

    # Lane-dense layout for the dominant HBM traffic: (B, C, H*W).
    # (For H*W < 128 a (B, HW, C) layout with C on lanes would be preferable;
    #  not implemented — test shapes keep H*W lane-dense.)
    x_flat = x.reshape(B, C, HW)

    # Fold the 1/C of the mean pooling into the avg-channel weights; flatten
    # to 1-D for cheap SMEM scalar indexing.
    w_flat = jnp.concatenate(
        [w[0].reshape(-1), (w[1] / C).reshape(-1)]).astype(jnp.float32)

    # Boundary-validity masks, built ONCE in the wrapper (hoisted out of the
    # per-grid-step body): rows 0..6 row masks, rows 7..13 col masks.
    pos = jnp.arange(HW, dtype=jnp.int32)
    row = pos // W
    col = pos % W
    row_masks = [((row + dh) >= 0) & ((row + dh) < H) for dh in range(-PAD, PAD + 1)]
    col_masks = [((col + dw) >= 0) & ((col + dw) < W) for dw in range(-PAD, PAD + 1)]
    masks = jnp.stack(row_masks + col_masks).astype(jnp.float32)  # (2*KH, HW)

    # --- Generation-aware block sizing --------------------------------------
    try:  # v5e/v6e: 128 MiB VMEM; v7x: 64 MiB per TensorCore.
        vmem_cap = int(pltpu.get_tpu_info().vmem_capacity_bytes)
    except Exception:
        vmem_cap = 64 << 20   # conservative fallback (v7x)
    if vmem_block_budget_bytes is None:
        vmem_block_budget_bytes = min(24 << 20, vmem_cap // 4)

    # Per batch element: double-buffered in+out blocks plus f32 intermediates
    # (pooled maps, 14 row-stage maps, conv/col temps, x*attention temp).
    per_elem = 4 * C * HW * isz + 2 * C * HW * 4 + 24 * HW * 4
    bblk = max(1, min(B, vmem_block_budget_bytes // max(per_elem, 1)))
    if B > 1:
        # Keep >= 2 grid steps so the "parallel" batch axis can shard across
        # v7x's two TensorCores (no-op on single-TC v5e/v6e).
        bblk = min(bblk, max(1, B // 2))
    grid = (pl.cdiv(B, bblk),)   # ragged last block OK: batch rows independent

    vmem_limit = int(min(max(32 << 20, per_elem * bblk + (8 << 20)),
                         (vmem_cap * 3) // 4))

    kernel = functools.partial(spatial_attention_kernel, H=H, W=W)
    out_flat = pl.pallas_call(
        kernel,
        out_shape=jax.ShapeDtypeStruct((B, C, HW), x.dtype),
        grid=grid,
        in_specs=[
            pl.BlockSpec(memory_space=pltpu.SMEM),                # conv weights
            pl.BlockSpec((2 * KH, HW), lambda b: (0, 0)),         # masks, VMEM-resident
            pl.BlockSpec((bblk, C, HW), lambda b: (b, 0, 0)),     # x batch block
        ],
        out_specs=pl.BlockSpec((bblk, C, HW), lambda b: (b, 0, 0)),
        compiler_params=pltpu.CompilerParams(
            dimension_semantics=("parallel",),    # batch blocks are independent
            vmem_limit_bytes=vmem_limit),
    )(w_flat, masks, x_flat)
    return out_flat.reshape(B, C, H, W)


def spatial_attention_reference(x, w):
    """Plain-JAX reference reproducing the PyTorch forward."""
    max_pool = jnp.max(x, axis=1, keepdims=True)
    avg_pool = jnp.mean(x, axis=1, keepdims=True)
    combined = jnp.concatenate([max_pool, avg_pool], axis=1)     # (B, 2, H, W)
    conv = jax.lax.conv_general_dilated(
        combined, w[None],                                       # (1, 2, 7, 7) OIHW
        window_strides=(1, 1),
        padding=((PAD, PAD), (PAD, PAD)),
        dimension_numbers=("NCHW", "OIHW", "NCHW"))
    return x * jax.nn.sigmoid(conv)


if __name__ == "__main__":
    key = jax.random.PRNGKey(0)
    kx, kw = jax.random.split(key)

    B, C, H, W = 2, 4, 16, 16
    x = jax.random.normal(kx, (B, C, H, W), dtype=jnp.float32)

    # Deterministic Conv2d(2, 1, 7, bias=False) weight, out-channel squeezed.
    fan_in = 2 * KH * KW
    bound = 1.0 / (fan_in ** 0.5)
    w = jax.random.uniform(kw, (2, KH, KW), jnp.float32, -bound, bound)

    out = spatial_attention(x, w)
    jax.block_until_ready(out)

    ref = spatial_attention_reference(x, w)
    assert out.shape == (B, C, H, W)
    assert jnp.max(jnp.abs(out - ref)) < 2e-5, "mismatch vs reference"

    print("KERNEL_OK")
</pallas_src>

<mosaic_0001>
module attributes {stable_mosaic.version = 11 : i64} {
  func.func @spatial_attention_kernel(%arg0: i32, %arg1: memref<98xf32, #tpu.memory_space<smem>>, %arg2: memref<14x256xf32, #tpu.memory_space<vmem>>, %arg3: memref<1x4x256xf32, #tpu.memory_space<vmem>>, %arg4: memref<1x4x256xf32, #tpu.memory_space<vmem>>) attributes {dimension_semantics = [#tpu.dimension_semantics<parallel>], iteration_bounds = array<i64: 2>, scalar_prefetch = 0 : i64, scratch_operands = 0 : i64, tpu.core_type = #tpu.core_type<tc>, window_params = [{transform_indices = @transform_0, window_bounds = array<i64: 98>}, {pipeline_mode = #tpu.pipeline_mode<synchronous>, transform_indices = @transform_1, window_bounds = array<i64: 14, 256>}, {transform_indices = @transform_2, window_bounds = array<i64: 1, 4, 256>}, {transform_indices = @transform_3, window_bounds = array<i64: 1, 4, 256>}]} {
    %c0 = arith.constant 0 : index
    %c0_0 = arith.constant 0 : index
    %c0_1 = arith.constant 0 : index
    %0 = vector.load %arg3[%c0, %c0_0, %c0_1] : memref<1x4x256xf32, #tpu.memory_space<vmem>>, vector<1x4x256xf32>
    %cst = arith.constant dense<0xFF800000> : vector<1x256xf32>
    %1 = vector.multi_reduction <maximumf>, %0, %cst [1] : vector<1x4x256xf32> to vector<1x256xf32>
    %cst_2 = arith.constant dense<0.000000e+00> : vector<1x256xf32>
    %2 = vector.multi_reduction <add>, %0, %cst_2 [1] : vector<1x4x256xf32> to vector<1x256xf32>
    %c0_3 = arith.constant 0 : index
    %3 = memref.load %arg1[%c0_3] : memref<98xf32, #tpu.memory_space<smem>>
    %c1 = arith.constant 1 : index
    %4 = memref.load %arg1[%c1] : memref<98xf32, #tpu.memory_space<smem>>
    %c2 = arith.constant 2 : index
    %5 = memref.load %arg1[%c2] : memref<98xf32, #tpu.memory_space<smem>>
    %c3 = arith.constant 3 : index
    %6 = memref.load %arg1[%c3] : memref<98xf32, #tpu.memory_space<smem>>
    %c4 = arith.constant 4 : index
    %7 = memref.load %arg1[%c4] : memref<98xf32, #tpu.memory_space<smem>>
    %c5 = arith.constant 5 : index
    %8 = memref.load %arg1[%c5] : memref<98xf32, #tpu.memory_space<smem>>
    %c6 = arith.constant 6 : index
    %9 = memref.load %arg1[%c6] : memref<98xf32, #tpu.memory_space<smem>>
    %c7 = arith.constant 7 : index
    %10 = memref.load %arg1[%c7] : memref<98xf32, #tpu.memory_space<smem>>
    %c8 = arith.constant 8 : index
    %11 = memref.load %arg1[%c8] : memref<98xf32, #tpu.memory_space<smem>>
    %c9 = arith.constant 9 : index
    %12 = memref.load %arg1[%c9] : memref<98xf32, #tpu.memory_space<smem>>
    %c10 = arith.constant 10 : index
    %13 = memref.load %arg1[%c10] : memref<98xf32, #tpu.memory_space<smem>>
    %c11 = arith.constant 11 : index
    %14 = memref.load %arg1[%c11] : memref<98xf32, #tpu.memory_space<smem>>
    %c12 = arith.constant 12 : index
    %15 = memref.load %arg1[%c12] : memref<98xf32, #tpu.memory_space<smem>>
    %c13 = arith.constant 13 : index
    %16 = memref.load %arg1[%c13] : memref<98xf32, #tpu.memory_space<smem>>
    %c14 = arith.constant 14 : index
    %17 = memref.load %arg1[%c14] : memref<98xf32, #tpu.memory_space<smem>>
    %c15 = arith.constant 15 : index
    %18 = memref.load %arg1[%c15] : memref<98xf32, #tpu.memory_space<smem>>
    %c16 = arith.constant 16 : index
    %19 = memref.load %arg1[%c16] : memref<98xf32, #tpu.memory_space<smem>>
    %c17 = arith.constant 17 : index
    %20 = memref.load %arg1[%c17] : memref<98xf32, #tpu.memory_space<smem>>
    %c18 = arith.constant 18 : index
    %21 = memref.load %arg1[%c18] : memref<98xf32, #tpu.memory_space<smem>>
    %c19 = arith.constant 19 : index
    %22 = memref.load %arg1[%c19] : memref<98xf32, #tpu.memory_space<smem>>
    %c20 = arith.constant 20 : index
    %23 = memref.load %arg1[%c20] : memref<98xf32, #tpu.memory_space<smem>>
    %c21 = arith.constant 21 : index
    %24 = memref.load %arg1[%c21] : memref<98xf32, #tpu.memory_space<smem>>
    %c22 = arith.constant 22 : index
    %25 = memref.load %arg1[%c22] : memref<98xf32, #tpu.memory_space<smem>>
    %c23 = arith.constant 23 : index
    %26 = memref.load %arg1[%c23] : memref<98xf32, #tpu.memory_space<smem>>
    %c24 = arith.constant 24 : index
    %27 = memref.load %arg1[%c24] : memref<98xf32, #tpu.memory_space<smem>>
    %c25 = arith.constant 25 : index
    %28 = memref.load %arg1[%c25] : memref<98xf32, #tpu.memory_space<smem>>
    %c26 = arith.constant 26 : index
    %29 = memref.load %arg1[%c26] : memref<98xf32, #tpu.memory_space<smem>>
    %c27 = arith.constant 27 : index
    %30 = memref.load %arg1[%c27] : memref<98xf32, #tpu.memory_space<smem>>
    %c28 = arith.constant 28 : index
    %31 = memref.load %arg1[%c28] : memref<98xf32, #tpu.memory_space<smem>>
    %c29 = arith.constant 29 : index
    %32 = memref.load %arg1[%c29] : memref<98xf32, #tpu.memory_space<smem>>
    %c30 = arith.constant 30 : index
    %33 = memref.load %arg1[%c30] : memref<98xf32, #tpu.memory_space<smem>>
    %c31 = arith.constant 31 : index
    %34 = memref.load %arg1[%c31] : memref<98xf32, #tpu.memory_space<smem>>
    %c32 = arith.constant 32 : index
    %35 = memref.load %arg1[%c32] : memref<98xf32, #tpu.memory_space<smem>>
    %c33 = arith.constant 33 : index
    %36 = memref.load %arg1[%c33] : memref<98xf32, #tpu.memory_space<smem>>
    %c34 = arith.constant 34 : index
    %37 = memref.load %arg1[%c34] : memref<98xf32, #tpu.memory_space<smem>>
    %c35 = arith.constant 35 : index
    %38 = memref.load %arg1[%c35] : memref<98xf32, #tpu.memory_space<smem>>
    %c36 = arith.constant 36 : index
    %39 = memref.load %arg1[%c36] : memref<98xf32, #tpu.memory_space<smem>>
    %c37 = arith.constant 37 : index
    %40 = memref.load %arg1[%c37] : memref<98xf32, #tpu.memory_space<smem>>
    %c38 = arith.constant 38 : index
    %41 = memref.load %arg1[%c38] : memref<98xf32, #tpu.memory_space<smem>>
    %c39 = arith.constant 39 : index
    %42 = memref.load %arg1[%c39] : memref<98xf32, #tpu.memory_space<smem>>
    %c40 = arith.constant 40 : index
    %43 = memref.load %arg1[%c40] : memref<98xf32, #tpu.memory_space<smem>>
    %c41 = arith.constant 41 : index
    %44 = memref.load %arg1[%c41] : memref<98xf32, #tpu.memory_space<smem>>
    %c42 = arith.constant 42 : index
    %45 = memref.load %arg1[%c42] : memref<98xf32, #tpu.memory_space<smem>>
    %c43 = arith.constant 43 : index
    %46 = memref.load %arg1[%c43] : memref<98xf32, #tpu.memory_space<smem>>
    %c44 = arith.constant 44 : index
    %47 = memref.load %arg1[%c44] : memref<98xf32, #tpu.memory_space<smem>>
    %c45 = arith.constant 45 : index
    %48 = memref.load %arg1[%c45] : memref<98xf32, #tpu.memory_space<smem>>
    %c46 = arith.constant 46 : index
    %49 = memref.load %arg1[%c46] : memref<98xf32, #tpu.memory_space<smem>>
    %c47 = arith.constant 47 : index
    %50 = memref.load %arg1[%c47] : memref<98xf32, #tpu.memory_space<smem>>
    %c48 = arith.constant 48 : index
    %51 = memref.load %arg1[%c48] : memref<98xf32, #tpu.memory_space<smem>>
    %c49 = arith.constant 49 : index
    %52 = memref.load %arg1[%c49] : memref<98xf32, #tpu.memory_space<smem>>
    %c50 = arith.constant 50 : index
    %53 = memref.load %arg1[%c50] : memref<98xf32, #tpu.memory_space<smem>>
    %c51 = arith.constant 51 : index
    %54 = memref.load %arg1[%c51] : memref<98xf32, #tpu.memory_space<smem>>
    %c52 = arith.constant 52 : index
    %55 = memref.load %arg1[%c52] : memref<98xf32, #tpu.memory_space<smem>>
    %c53 = arith.constant 53 : index
    %56 = memref.load %arg1[%c53] : memref<98xf32, #tpu.memory_space<smem>>
    %c54 = arith.constant 54 : index
    %57 = memref.load %arg1[%c54] : memref<98xf32, #tpu.memory_space<smem>>
    %c55 = arith.constant 55 : index
    %58 = memref.load %arg1[%c55] : memref<98xf32, #tpu.memory_space<smem>>
    %c56 = arith.constant 56 : index
    %59 = memref.load %arg1[%c56] : memref<98xf32, #tpu.memory_space<smem>>
    %c57 = arith.constant 57 : index
    %60 = memref.load %arg1[%c57] : memref<98xf32, #tpu.memory_space<smem>>
    %c58 = arith.constant 58 : index
    %61 = memref.load %arg1[%c58] : memref<98xf32, #tpu.memory_space<smem>>
    %c59 = arith.constant 59 : index
    %62 = memref.load %arg1[%c59] : memref<98xf32, #tpu.memory_space<smem>>
    %c60 = arith.constant 60 : index
    %63 = memref.load %arg1[%c60] : memref<98xf32, #tpu.memory_space<smem>>
    %c61 = arith.constant 61 : index
    %64 = memref.load %arg1[%c61] : memref<98xf32, #tpu.memory_space<smem>>
    %c62 = arith.constant 62 : index
    %65 = memref.load %arg1[%c62] : memref<98xf32, #tpu.memory_space<smem>>
    %c63 = arith.constant 63 : index
    %66 = memref.load %arg1[%c63] : memref<98xf32, #tpu.memory_space<smem>>
    %c64 = arith.constant 64 : index
    %67 = memref.load %arg1[%c64] : memref<98xf32, #tpu.memory_space<smem>>
    %c65 = arith.constant 65 : index
    %68 = memref.load %arg1[%c65] : memref<98xf32, #tpu.memory_space<smem>>
    %c66 = arith.constant 66 : index
    %69 = memref.load %arg1[%c66] : memref<98xf32, #tpu.memory_space<smem>>
    %c67 = arith.constant 67 : index
    %70 = memref.load %arg1[%c67] : memref<98xf32, #tpu.memory_space<smem>>
    %c68 = arith.constant 68 : index
    %71 = memref.load %arg1[%c68] : memref<98xf32, #tpu.memory_space<smem>>
    %c69 = arith.constant 69 : index
    %72 = memref.load %arg1[%c69] : memref<98xf32, #tpu.memory_space<smem>>
    %c70 = arith.constant 70 : index
    %73 = memref.load %arg1[%c70] : memref<98xf32, #tpu.memory_space<smem>>
    %c71 = arith.constant 71 : index
    %74 = memref.load %arg1[%c71] : memref<98xf32, #tpu.memory_space<smem>>
    %c72 = arith.constant 72 : index
    %75 = memref.load %arg1[%c72] : memref<98xf32, #tpu.memory_space<smem>>
    %c73 = arith.constant 73 : index
    %76 = memref.load %arg1[%c73] : memref<98xf32, #tpu.memory_space<smem>>
    %c74 = arith.constant 74 : index
    %77 = memref.load %arg1[%c74] : memref<98xf32, #tpu.memory_space<smem>>
    %c75 = arith.constant 75 : index
    %78 = memref.load %arg1[%c75] : memref<98xf32, #tpu.memory_space<smem>>
    %c76 = arith.constant 76 : index
    %79 = memref.load %arg1[%c76] : memref<98xf32, #tpu.memory_space<smem>>
    %c77 = arith.constant 77 : index
    %80 = memref.load %arg1[%c77] : memref<98xf32, #tpu.memory_space<smem>>
    %c78 = arith.constant 78 : index
    %81 = memref.load %arg1[%c78] : memref<98xf32, #tpu.memory_space<smem>>
    %c79 = arith.constant 79 : index
    %82 = memref.load %arg1[%c79] : memref<98xf32, #tpu.memory_space<smem>>
    %c80 = arith.constant 80 : index
    %83 = memref.load %arg1[%c80] : memref<98xf32, #tpu.memory_space<smem>>
    %c81 = arith.constant 81 : index
    %84 = memref.load %arg1[%c81] : memref<98xf32, #tpu.memory_space<smem>>
    %c82 = arith.constant 82 : index
    %85 = memref.load %arg1[%c82] : memref<98xf32, #tpu.memory_space<smem>>
    %c83 = arith.constant 83 : index
    %86 = memref.load %arg1[%c83] : memref<98xf32, #tpu.memory_space<smem>>
    %c84 = arith.constant 84 : index
    %87 = memref.load %arg1[%c84] : memref<98xf32, #tpu.memory_space<smem>>
    %c85 = arith.constant 85 : index
    %88 = memref.load %arg1[%c85] : memref<98xf32, #tpu.memory_space<smem>>
    %c86 = arith.constant 86 : index
    %89 = memref.load %arg1[%c86] : memref<98xf32, #tpu.memory_space<smem>>
    %c87 = arith.constant 87 : index
    %90 = memref.load %arg1[%c87] : memref<98xf32, #tpu.memory_space<smem>>
    %c88 = arith.constant 88 : index
    %91 = memref.load %arg1[%c88] : memref<98xf32, #tpu.memory_space<smem>>
    %c89 = arith.constant 89 : index
    %92 = memref.load %arg1[%c89] : memref<98xf32, #tpu.memory_space<smem>>
    %c90 = arith.constant 90 : index
    %93 = memref.load %arg1[%c90] : memref<98xf32, #tpu.memory_space<smem>>
    %c91 = arith.constant 91 : index
    %94 = memref.load %arg1[%c91] : memref<98xf32, #tpu.memory_space<smem>>
    %c92 = arith.constant 92 : index
    %95 = memref.load %arg1[%c92] : memref<98xf32, #tpu.memory_space<smem>>
    %c93 = arith.constant 93 : index
    %96 = memref.load %arg1[%c93] : memref<98xf32, #tpu.memory_space<smem>>
    %c94 = arith.constant 94 : index
    %97 = memref.load %arg1[%c94] : memref<98xf32, #tpu.memory_space<smem>>
    %c95 = arith.constant 95 : index
    %98 = memref.load %arg1[%c95] : memref<98xf32, #tpu.memory_space<smem>>
    %c96 = arith.constant 96 : index
    %99 = memref.load %arg1[%c96] : memref<98xf32, #tpu.memory_space<smem>>
    %c97 = arith.constant 97 : index
    %100 = memref.load %arg1[%c97] : memref<98xf32, #tpu.memory_space<smem>>
    %c48_i32 = arith.constant 48 : i32
    %101 = tpu.dynamic_rotate %1 by %c48_i32 dim 1 : vector<1x256xf32>, i32 -> vector<1x256xf32>
    %c48_i32_4 = arith.constant 48 : i32
    %102 = tpu.dynamic_rotate %2 by %c48_i32_4 dim 1 : vector<1x256xf32>, i32 -> vector<1x256xf32>
    %c0_5 = arith.constant 0 : index
    %c0_6 = arith.constant 0 : index
    %103 = vector.load %arg2[%c0_5, %c0_6] : memref<14x256xf32, #tpu.memory_space<vmem>>, vector<1x256xf32>
    %104 = arith.mulf %101, %103 : vector<1x256xf32>
    %105 = arith.mulf %102, %103 : vector<1x256xf32>
    %c32_i32 = arith.constant 32 : i32
    %106 = tpu.dynamic_rotate %1 by %c32_i32 dim 1 : vector<1x256xf32>, i32 -> vector<1x256xf32>
    %c32_i32_7 = arith.constant 32 : i32
    %107 = tpu.dynamic_rotate %2 by %c32_i32_7 dim 1 : vector<1x256xf32>, i32 -> vector<1x256xf32>
    %c1_8 = arith.constant 1 : index
    %c0_9 = arith.constant 0 : index
    %108 = vector.load %arg2[%c1_8, %c0_9] : memref<14x256xf32, #tpu.memory_space<vmem>>, vector<1x256xf32>
    %109 = arith.mulf %106, %108 : vector<1x256xf32>
    %110 = arith.mulf %107, %108 : vector<1x256xf32>
    %c16_i32 = arith.constant 16 : i32
    %111 = tpu.dynamic_rotate %1 by %c16_i32 dim 1 : vector<1x256xf32>, i32 -> vector<1x256xf32>
    %c16_i32_10 = arith.constant 16 : i32
    %112 = tpu.dynamic_rotate %2 by %c16_i32_10 dim 1 : vector<1x256xf32>, i32 -> vector<1x256xf32>
    %c2_11 = arith.constant 2 : index
    %c0_12 = arith.constant 0 : index
    %113 = vector.load %arg2[%c2_11, %c0_12] : memref<14x256xf32, #tpu.memory_space<vmem>>, vector<1x256xf32>
    %114 = arith.mulf %111, %113 : vector<1x256xf32>
    %115 = arith.mulf %112, %113 : vector<1x256xf32>
    %c3_13 = arith.constant 3 : index
    %c0_14 = arith.constant 0 : index
    %116 = vector.load %arg2[%c3_13, %c0_14] : memref<14x256xf32, #tpu.memory_space<vmem>>, vector<1x256xf32>
    %117 = arith.mulf %1, %116 : vector<1x256xf32>
    %118 = arith.mulf %2, %116 : vector<1x256xf32>
    %c240_i32 = arith.constant 240 : i32
    %119 = tpu.dynamic_rotate %1 by %c240_i32 dim 1 : vector<1x256xf32>, i32 -> vector<1x256xf32>
    %c240_i32_15 = arith.constant 240 : i32
    %120 = tpu.dynamic_rotate %2 by %c240_i32_15 dim 1 : vector<1x256xf32>, i32 -> vector<1x256xf32>
    %c4_16 = arith.constant 4 : index
    %c0_17 = arith.constant 0 : index
    %121 = vector.load %arg2[%c4_16, %c0_17] : memref<14x256xf32, #tpu.memory_space<vmem>>, vector<1x256xf32>
    %122 = arith.mulf %119, %121 : vector<1x256xf32>
    %123 = arith.mulf %120, %121 : vector<1x256xf32>
    %c224_i32 = arith.constant 224 : i32
    %124 = tpu.dynamic_rotate %1 by %c224_i32 dim 1 : vector<1x256xf32>, i32 -> vector<1x256xf32>
    %c224_i32_18 = arith.constant 224 : i32
    %125 = tpu.dynamic_rotate %2 by %c224_i32_18 dim 1 : vector<1x256xf32>, i32 -> vector<1x256xf32>
    %c5_19 = arith.constant 5 : index
    %c0_20 = arith.constant 0 : index
    %126 = vector.load %arg2[%c5_19, %c0_20] : memref<14x256xf32, #tpu.memory_space<vmem>>, vector<1x256xf32>
    %127 = arith.mulf %124, %126 : vector<1x256xf32>
    %128 = arith.mulf %125, %126 : vector<1x256xf32>
    %c208_i32 = arith.constant 208 : i32
    %129 = tpu.dynamic_rotate %1 by %c208_i32 dim 1 : vector<1x256xf32>, i32 -> vector<1x256xf32>
    %c208_i32_21 = arith.constant 208 : i32
    %130 = tpu.dynamic_rotate %2 by %c208_i32_21 dim 1 : vector<1x256xf32>, i32 -> vector<1x256xf32>
    %c6_22 = arith.constant 6 : index
    %c0_23 = arith.constant 0 : index
    %131 = vector.load %arg2[%c6_22, %c0_23] : memref<14x256xf32, #tpu.memory_space<vmem>>, vector<1x256xf32>
    %132 = arith.mulf %129, %131 : vector<1x256xf32>
    %133 = arith.mulf %130, %131 : vector<1x256xf32>
    %134 = vector.broadcast %3 : f32 to vector<1x256xf32>
    %135 = arith.mulf %134, %104 : vector<1x256xf32>
    %136 = vector.broadcast %52 : f32 to vector<1x256xf32>
    %137 = arith.mulf %136, %105 : vector<1x256xf32>
    %138 = arith.addf %135, %137 : vector<1x256xf32>
    %139 = vector.broadcast %10 : f32 to vector<1x256xf32>
    %140 = arith.mulf %139, %109 : vector<1x256xf32>
    %141 = arith.addf %138, %140 : vector<1x256xf32>
    %142 = vector.broadcast %59 : f32 to vector<1x256xf32>
    %143 = arith.mulf %142, %110 : vector<1x256xf32>
    %144 = arith.addf %141, %143 : vector<1x256xf32>
    %145 = vector.broadcast %17 : f32 to vector<1x256xf32>
    %146 = arith.mulf %145, %114 : vector<1x256xf32>
    %147 = arith.addf %144, %146 : vector<1x256xf32>
    %148 = vector.broadcast %66 : f32 to vector<1x256xf32>
    %149 = arith.mulf %148, %115 : vector<1x256xf32>
    %150 = arith.addf %147, %149 : vector<1x256xf32>
    %151 = vector.broadcast %24 : f32 to vector<1x256xf32>
    %152 = arith.mulf %151, %117 : vector<1x256xf32>
    %153 = arith.addf %150, %152 : vector<1x256xf32>
    %154 = vector.broadcast %73 : f32 to vector<1x256xf32>
    %155 = arith.mulf %154, %118 : vector<1x256xf32>
    %156 = arith.addf %153, %155 : vector<1x256xf32>
    %157 = vector.broadcast %31 : f32 to vector<1x256xf32>
    %158 = arith.mulf %157, %122 : vector<1x256xf32>
    %159 = arith.addf %156, %158 : vector<1x256xf32>
    %160 = vector.broadcast %80 : f32 to vector<1x256xf32>
    %161 = arith.mulf %160, %123 : vector<1x256xf32>
    %162 = arith.addf %159, %161 : vector<1x256xf32>
    %163 = vector.broadcast %38 : f32 to vector<1x256xf32>
    %164 = arith.mulf %163, %127 : vector<1x256xf32>
    %165 = arith.addf %162, %164 : vector<1x256xf32>
    %166 = vector.broadcast %87 : f32 to vector<1x256xf32>
    %167 = arith.mulf %166, %128 : vector<1x256xf32>
    %168 = arith.addf %165, %167 : vector<1x256xf32>
    %169 = vector.broadcast %45 : f32 to vector<1x256xf32>
    %170 = arith.mulf %169, %132 : vector<1x256xf32>
    %171 = arith.addf %168, %170 : vector<1x256xf32>
    %172 = vector.broadcast %94 : f32 to vector<1x256xf32>
    %173 = arith.mulf %172, %133 : vector<1x256xf32>
    %174 = arith.addf %171, %173 : vector<1x256xf32>
    %c3_i32 = arith.constant 3 : i32
    %175 = tpu.dynamic_rotate %174 by %c3_i32 dim 1 : vector<1x256xf32>, i32 -> vector<1x256xf32>
    %c7_24 = arith.constant 7 : index
    %c0_25 = arith.constant 0 : index
    %176 = vector.load %arg2[%c7_24, %c0_25] : memref<14x256xf32, #tpu.memory_space<vmem>>, vector<1x256xf32>
    %177 = arith.mulf %175, %176 : vector<1x256xf32>
    %178 = vector.broadcast %4 : f32 to vector<1x256xf32>
    %179 = arith.mulf %178, %104 : vector<1x256xf32>
    %180 = vector.broadcast %53 : f32 to vector<1x256xf32>
    %181 = arith.mulf %180, %105 : vector<1x256xf32>
    %182 = arith.addf %179, %181 : vector<1x256xf32>
    %183 = vector.broadcast %11 : f32 to vector<1x256xf32>
    %184 = arith.mulf %183, %109 : vector<1x256xf32>
    %185 = arith.addf %182, %184 : vector<1x256xf32>
    %186 = vector.broadcast %60 : f32 to vector<1x256xf32>
    %187 = arith.mulf %186, %110 : vector<1x256xf32>
    %188 = arith.addf %185, %187 : vector<1x256xf32>
    %189 = vector.broadcast %18 : f32 to vector<1x256xf32>
    %190 = arith.mulf %189, %114 : vector<1x256xf32>
    %191 = arith.addf %188, %190 : vector<1x256xf32>
    %192 = vector.broadcast %67 : f32 to vector<1x256xf32>
    %193 = arith.mulf %192, %115 : vector<1x256xf32>
    %194 = arith.addf %191, %193 : vector<1x256xf32>
    %195 = vector.broadcast %25 : f32 to vector<1x256xf32>
    %196 = arith.mulf %195, %117 : vector<1x256xf32>
    %197 = arith.addf %194, %196 : vector<1x256xf32>
    %198 = vector.broadcast %74 : f32 to vector<1x256xf32>
    %199 = arith.mulf %198, %118 : vector<1x256xf32>
    %200 = arith.addf %197, %199 : vector<1x256xf32>
    %201 = vector.broadcast %32 : f32 to vector<1x256xf32>
    %202 = arith.mulf %201, %122 : vector<1x256xf32>
    %203 = arith.addf %200, %202 : vector<1x256xf32>
    %204 = vector.broadcast %81 : f32 to vector<1x256xf32>
    %205 = arith.mulf %204, %123 : vector<1x256xf32>
    %206 = arith.addf %203, %205 : vector<1x256xf32>
    %207 = vector.broadcast %39 : f32 to vector<1x256xf32>
    %208 = arith.mulf %207, %127 : vector<1x256xf32>
    %209 = arith.addf %206, %208 : vector<1x256xf32>
    %210 = vector.broadcast %88 : f32 to vector<1x256xf32>
    %211 = arith.mulf %210, %128 : vector<1x256xf32>
    %212 = arith.addf %209, %211 : vector<1x256xf32>
    %213 = vector.broadcast %46 : f32 to vector<1x256xf32>
    %214 = arith.mulf %213, %132 : vector<1x256xf32>
    %215 = arith.addf %212, %214 : vector<1x256xf32>
    %216 = vector.broadcast %95 : f32 to vector<1x256xf32>
    %217 = arith.mulf %216, %133 : vector<1x256xf32>
    %218 = arith.addf %215, %217 : vector<1x256xf32>
    %c2_i32 = arith.constant 2 : i32
    %219 = tpu.dynamic_rotate %218 by %c2_i32 dim 1 : vector<1x256xf32>, i32 -> vector<1x256xf32>
    %c8_26 = arith.constant 8 : index
    %c0_27 = arith.constant 0 : index
    %220 = vector.load %arg2[%c8_26, %c0_27] : memref<14x256xf32, #tpu.memory_space<vmem>>, vector<1x256xf32>
    %221 = arith.mulf %219, %220 : vector<1x256xf32>
    %222 = arith.addf %177, %221 : vector<1x256xf32>
    %223 = vector.broadcast %5 : f32 to vector<1x256xf32>
    %224 = arith.mulf %223, %104 : vector<1x256xf32>
    %225 = vector.broadcast %54 : f32 to vector<1x256xf32>
    %226 = arith.mulf %225, %105 : vector<1x256xf32>
    %227 = arith.addf %224, %226 : vector<1x256xf32>
    %228 = vector.broadcast %12 : f32 to vector<1x256xf32>
    %229 = arith.mulf %228, %109 : vector<1x256xf32>
    %230 = arith.addf %227, %229 : vector<1x256xf32>
    %231 = vector.broadcast %61 : f32 to vector<1x256xf32>
    %232 = arith.mulf %231, %110 : vector<1x256xf32>
    %233 = arith.addf %230, %232 : vector<1x256xf32>
    %234 = vector.broadcast %19 : f32 to vector<1x256xf32>
    %235 = arith.mulf %234, %114 : vector<1x256xf32>
    %236 = arith.addf %233, %235 : vector<1x256xf32>
    %237 = vector.broadcast %68 : f32 to vector<1x256xf32>
    %238 = arith.mulf %237, %115 : vector<1x256xf32>
    %239 = arith.addf %236, %238 : vector<1x256xf32>
    %240 = vector.broadcast %26 : f32 to vector<1x256xf32>
    %241 = arith.mulf %240, %117 : vector<1x256xf32>
    %242 = arith.addf %239, %241 : vector<1x256xf32>
    %243 = vector.broadcast %75 : f32 to vector<1x256xf32>
    %244 = arith.mulf %243, %118 : vector<1x256xf32>
    %245 = arith.addf %242, %244 : vector<1x256xf32>
    %246 = vector.broadcast %33 : f32 to vector<1x256xf32>
    %247 = arith.mulf %246, %122 : vector<1x256xf32>
    %248 = arith.addf %245, %247 : vector<1x256xf32>
    %249 = vector.broadcast %82 : f32 to vector<1x256xf32>
    %250 = arith.mulf %249, %123 : vector<1x256xf32>
    %251 = arith.addf %248, %250 : vector<1x256xf32>
    %252 = vector.broadcast %40 : f32 to vector<1x256xf32>
    %253 = arith.mulf %252, %127 : vector<1x256xf32>
    %254 = arith.addf %251, %253 : vector<1x256xf32>
    %255 = vector.broadcast %89 : f32 to vector<1x256xf32>
    %256 = arith.mulf %255, %128 : vector<1x256xf32>
    %257 = arith.addf %254, %256 : vector<1x256xf32>
    %258 = vector.broadcast %47 : f32 to vector<1x256xf32>
    %259 = arith.mulf %258, %132 : vector<1x256xf32>
    %260 = arith.addf %257, %259 : vector<1x256xf32>
    %261 = vector.broadcast %96 : f32 to vector<1x256xf32>
    %262 = arith.mulf %261, %133 : vector<1x256xf32>
    %263 = arith.addf %260, %262 : vector<1x256xf32>
    %c1_i32 = arith.constant 1 : i32
    %264 = tpu.dynamic_rotate %263 by %c1_i32 dim 1 : vector<1x256xf32>, i32 -> vector<1x256xf32>
    %c9_28 = arith.constant 9 : index
    %c0_29 = arith.constant 0 : index
    %265 = vector.load %arg2[%c9_28, %c0_29] : memref<14x256xf32, #tpu.memory_space<vmem>>, vector<1x256xf32>
    %266 = arith.mulf %264, %265 : vector<1x256xf32>
    %267 = arith.addf %222, %266 : vector<1x256xf32>
    %268 = vector.broadcast %6 : f32 to vector<1x256xf32>
    %269 = arith.mulf %268, %104 : vector<1x256xf32>
    %270 = vector.broadcast %55 : f32 to vector<1x256xf32>
    %271 = arith.mulf %270, %105 : vector<1x256xf32>
    %272 = arith.addf %269, %271 : vector<1x256xf32>
    %273 = vector.broadcast %13 : f32 to vector<1x256xf32>
    %274 = arith.mulf %273, %109 : vector<1x256xf32>
    %275 = arith.addf %272, %274 : vector<1x256xf32>
    %276 = vector.broadcast %62 : f32 to vector<1x256xf32>
    %277 = arith.mulf %276, %110 : vector<1x256xf32>
    %278 = arith.addf %275, %277 : vector<1x256xf32>
    %279 = vector.broadcast %20 : f32 to vector<1x256xf32>
    %280 = arith.mulf %279, %114 : vector<1x256xf32>
    %281 = arith.addf %278, %280 : vector<1x256xf32>
    %282 = vector.broadcast %69 : f32 to vector<1x256xf32>
    %283 = arith.mulf %282, %115 : vector<1x256xf32>
    %284 = arith.addf %281, %283 : vector<1x256xf32>
    %285 = vector.broadcast %27 : f32 to vector<1x256xf32>
    %286 = arith.mulf %285, %117 : vector<1x256xf32>
    %287 = arith.addf %284, %286 : vector<1x256xf32>
    %288 = vector.broadcast %76 : f32 to vector<1x256xf32>
    %289 = arith.mulf %288, %118 : vector<1x256xf32>
    %290 = arith.addf %287, %289 : vector<1x256xf32>
    %291 = vector.broadcast %34 : f32 to vector<1x256xf32>
    %292 = arith.mulf %291, %122 : vector<1x256xf32>
    %293 = arith.addf %290, %292 : vector<1x256xf32>
    %294 = vector.broadcast %83 : f32 to vector<1x256xf32>
    %295 = arith.mulf %294, %123 : vector<1x256xf32>
    %296 = arith.addf %293, %295 : vector<1x256xf32>
    %297 = vector.broadcast %41 : f32 to vector<1x256xf32>
    %298 = arith.mulf %297, %127 : vector<1x256xf32>
    %299 = arith.addf %296, %298 : vector<1x256xf32>
    %300 = vector.broadcast %90 : f32 to vector<1x256xf32>
    %301 = arith.mulf %300, %128 : vector<1x256xf32>
    %302 = arith.addf %299, %301 : vector<1x256xf32>
    %303 = vector.broadcast %48 : f32 to vector<1x256xf32>
    %304 = arith.mulf %303, %132 : vector<1x256xf32>
    %305 = arith.addf %302, %304 : vector<1x256xf32>
    %306 = vector.broadcast %97 : f32 to vector<1x256xf32>
    %307 = arith.mulf %306, %133 : vector<1x256xf32>
    %308 = arith.addf %305, %307 : vector<1x256xf32>
    %c10_30 = arith.constant 10 : index
    %c0_31 = arith.constant 0 : index
    %309 = vector.load %arg2[%c10_30, %c0_31] : memref<14x256xf32, #tpu.memory_space<vmem>>, vector<1x256xf32>
    %310 = arith.mulf %308, %309 : vector<1x256xf32>
    %311 = arith.addf %267, %310 : vector<1x256xf32>
    %312 = vector.broadcast %7 : f32 to vector<1x256xf32>
    %313 = arith.mulf %312, %104 : vector<1x256xf32>
    %314 = vector.broadcast %56 : f32 to vector<1x256xf32>
    %315 = arith.mulf %314, %105 : vector<1x256xf32>
    %316 = arith.addf %313, %315 : vector<1x256xf32>
    %317 = vector.broadcast %14 : f32 to vector<1x256xf32>
    %318 = arith.mulf %317, %109 : vector<1x256xf32>
    %319 = arith.addf %316, %318 : vector<1x256xf32>
    %320 = vector.broadcast %63 : f32 to vector<1x256xf32>
    %321 = arith.mulf %320, %110 : vector<1x256xf32>
    %322 = arith.addf %319, %321 : vector<1x256xf32>
    %323 = vector.broadcast %21 : f32 to vector<1x256xf32>
    %324 = arith.mulf %323, %114 : vector<1x256xf32>
    %325 = arith.addf %322, %324 : vector<1x256xf32>
    %326 = vector.broadcast %70 : f32 to vector<1x256xf32>
    %327 = arith.mulf %326, %115 : vector<1x256xf32>
    %328 = arith.addf %325, %327 : vector<1x256xf32>
    %329 = vector.broadcast %28 : f32 to vector<1x256xf32>
    %330 = arith.mulf %329, %117 : vector<1x256xf32>
    %331 = arith.addf %328, %330 : vector<1x256xf32>
    %332 = vector.broadcast %77 : f32 to vector<1x256xf32>
    %333 = arith.mulf %332, %118 : vector<1x256xf32>
    %334 = arith.addf %331, %333 : vector<1x256xf32>
    %335 = vector.broadcast %35 : f32 to vector<1x256xf32>
    %336 = arith.mulf %335, %122 : vector<1x256xf32>
    %337 = arith.addf %334, %336 : vector<1x256xf32>
    %338 = vector.broadcast %84 : f32 to vector<1x256xf32>
    %339 = arith.mulf %338, %123 : vector<1x256xf32>
    %340 = arith.addf %337, %339 : vector<1x256xf32>
    %341 = vector.broadcast %42 : f32 to vector<1x256xf32>
    %342 = arith.mulf %341, %127 : vector<1x256xf32>
    %343 = arith.addf %340, %342 : vector<1x256xf32>
    %344 = vector.broadcast %91 : f32 to vector<1x256xf32>
    %345 = arith.mulf %344, %128 : vector<1x256xf32>
    %346 = arith.addf %343, %345 : vector<1x256xf32>
    %347 = vector.broadcast %49 : f32 to vector<1x256xf32>
    %348 = arith.mulf %347, %132 : vector<1x256xf32>
    %349 = arith.addf %346, %348 : vector<1x256xf32>
    %350 = vector.broadcast %98 : f32 to vector<1x256xf32>
    %351 = arith.mulf %350, %133 : vector<1x256xf32>
    %352 = arith.addf %349, %351 : vector<1x256xf32>
    %c255_i32 = arith.constant 255 : i32
    %353 = tpu.dynamic_rotate %352 by %c255_i32 dim 1 : vector<1x256xf32>, i32 -> vector<1x256xf32>
    %c11_32 = arith.constant 11 : index
    %c0_33 = arith.constant 0 : index
    %354 = vector.load %arg2[%c11_32, %c0_33] : memref<14x256xf32, #tpu.memory_space<vmem>>, vector<1x256xf32>
    %355 = arith.mulf %353, %354 : vector<1x256xf32>
    %356 = arith.addf %311, %355 : vector<1x256xf32>
    %357 = vector.broadcast %8 : f32 to vector<1x256xf32>
    %358 = arith.mulf %357, %104 : vector<1x256xf32>
    %359 = vector.broadcast %57 : f32 to vector<1x256xf32>
    %360 = arith.mulf %359, %105 : vector<1x256xf32>
    %361 = arith.addf %358, %360 : vector<1x256xf32>
    %362 = vector.broadcast %15 : f32 to vector<1x256xf32>
    %363 = arith.mulf %362, %109 : vector<1x256xf32>
    %364 = arith.addf %361, %363 : vector<1x256xf32>
    %365 = vector.broadcast %64 : f32 to vector<1x256xf32>
    %366 = arith.mulf %365, %110 : vector<1x256xf32>
    %367 = arith.addf %364, %366 : vector<1x256xf32>
    %368 = vector.broadcast %22 : f32 to vector<1x256xf32>
    %369 = arith.mulf %368, %114 : vector<1x256xf32>
    %370 = arith.addf %367, %369 : vector<1x256xf32>
    %371 = vector.broadcast %71 : f32 to vector<1x256xf32>
    %372 = arith.mulf %371, %115 : vector<1x256xf32>
    %373 = arith.addf %370, %372 : vector<1x256xf32>
    %374 = vector.broadcast %29 : f32 to vector<1x256xf32>
    %375 = arith.mulf %374, %117 : vector<1x256xf32>
    %376 = arith.addf %373, %375 : vector<1x256xf32>
    %377 = vector.broadcast %78 : f32 to vector<1x256xf32>
    %378 = arith.mulf %377, %118 : vector<1x256xf32>
    %379 = arith.addf %376, %378 : vector<1x256xf32>
    %380 = vector.broadcast %36 : f32 to vector<1x256xf32>
    %381 = arith.mulf %380, %122 : vector<1x256xf32>
    %382 = arith.addf %379, %381 : vector<1x256xf32>
    %383 = vector.broadcast %85 : f32 to vector<1x256xf32>
    %384 = arith.mulf %383, %123 : vector<1x256xf32>
    %385 = arith.addf %382, %384 : vector<1x256xf32>
    %386 = vector.broadcast %43 : f32 to vector<1x256xf32>
    %387 = arith.mulf %386, %127 : vector<1x256xf32>
    %388 = arith.addf %385, %387 : vector<1x256xf32>
    %389 = vector.broadcast %92 : f32 to vector<1x256xf32>
    %390 = arith.mulf %389, %128 : vector<1x256xf32>
    %391 = arith.addf %388, %390 : vector<1x256xf32>
    %392 = vector.broadcast %50 : f32 to vector<1x256xf32>
    %393 = arith.mulf %392, %132 : vector<1x256xf32>
    %394 = arith.addf %391, %393 : vector<1x256xf32>
    %395 = vector.broadcast %99 : f32 to vector<1x256xf32>
    %396 = arith.mulf %395, %133 : vector<1x256xf32>
    %397 = arith.addf %394, %396 : vector<1x256xf32>
    %c254_i32 = arith.constant 254 : i32
    %398 = tpu.dynamic_rotate %397 by %c254_i32 dim 1 : vector<1x256xf32>, i32 -> vector<1x256xf32>
    %c12_34 = arith.constant 12 : index
    %c0_35 = arith.constant 0 : index
    %399 = vector.load %arg2[%c12_34, %c0_35] : memref<14x256xf32, #tpu.memory_space<vmem>>, vector<1x256xf32>
    %400 = arith.mulf %398, %399 : vector<1x256xf32>
    %401 = arith.addf %356, %400 : vector<1x256xf32>
    %402 = vector.broadcast %9 : f32 to vector<1x256xf32>
    %403 = arith.mulf %402, %104 : vector<1x256xf32>
    %404 = vector.broadcast %58 : f32 to vector<1x256xf32>
    %405 = arith.mulf %404, %105 : vector<1x256xf32>
    %406 = arith.addf %403, %405 : vector<1x256xf32>
    %407 = vector.broadcast %16 : f32 to vector<1x256xf32>
    %408 = arith.mulf %407, %109 : vector<1x256xf32>
    %409 = arith.addf %406, %408 : vector<1x256xf32>
    %410 = vector.broadcast %65 : f32 to vector<1x256xf32>
    %411 = arith.mulf %410, %110 : vector<1x256xf32>
    %412 = arith.addf %409, %411 : vector<1x256xf32>
    %413 = vector.broadcast %23 : f32 to vector<1x256xf32>
    %414 = arith.mulf %413, %114 : vector<1x256xf32>
    %415 = arith.addf %412, %414 : vector<1x256xf32>
    %416 = vector.broadcast %72 : f32 to vector<1x256xf32>
    %417 = arith.mulf %416, %115 : vector<1x256xf32>
    %418 = arith.addf %415, %417 : vector<1x256xf32>
    %419 = vector.broadcast %30 : f32 to vector<1x256xf32>
    %420 = arith.mulf %419, %117 : vector<1x256xf32>
    %421 = arith.addf %418, %420 : vector<1x256xf32>
    %422 = vector.broadcast %79 : f32 to vector<1x256xf32>
    %423 = arith.mulf %422, %118 : vector<1x256xf32>
    %424 = arith.addf %421, %423 : vector<1x256xf32>
    %425 = vector.broadcast %37 : f32 to vector<1x256xf32>
    %426 = arith.mulf %425, %122 : vector<1x256xf32>
    %427 = arith.addf %424, %426 : vector<1x256xf32>
    %428 = vector.broadcast %86 : f32 to vector<1x256xf32>
    %429 = arith.mulf %428, %123 : vector<1x256xf32>
    %430 = arith.addf %427, %429 : vector<1x256xf32>
    %431 = vector.broadcast %44 : f32 to vector<1x256xf32>
    %432 = arith.mulf %431, %127 : vector<1x256xf32>
    %433 = arith.addf %430, %432 : vector<1x256xf32>
    %434 = vector.broadcast %93 : f32 to vector<1x256xf32>
    %435 = arith.mulf %434, %128 : vector<1x256xf32>
    %436 = arith.addf %433, %435 : vector<1x256xf32>
    %437 = vector.broadcast %51 : f32 to vector<1x256xf32>
    %438 = arith.mulf %437, %132 : vector<1x256xf32>
    %439 = arith.addf %436, %438 : vector<1x256xf32>
    %440 = vector.broadcast %100 : f32 to vector<1x256xf32>
    %441 = arith.mulf %440, %133 : vector<1x256xf32>
    %442 = arith.addf %439, %441 : vector<1x256xf32>
    %c253_i32 = arith.constant 253 : i32
    %443 = tpu.dynamic_rotate %442 by %c253_i32 dim 1 : vector<1x256xf32>, i32 -> vector<1x256xf32>
    %c13_36 = arith.constant 13 : index
    %c0_37 = arith.constant 0 : index
    %444 = vector.load %arg2[%c13_36, %c0_37] : memref<14x256xf32, #tpu.memory_space<vmem>>, vector<1x256xf32>
    %445 = arith.mulf %443, %444 : vector<1x256xf32>
    %446 = arith.addf %401, %445 : vector<1x256xf32>
    %447 = arith.negf %446 : vector<1x256xf32>
    %448 = math.exp %447 : vector<1x256xf32>
    %cst_38 = arith.constant 1.000000e+00 : f32
    %449 = vector.broadcast %cst_38 : f32 to vector<1x256xf32>
    %450 = arith.addf %449, %448 : vector<1x256xf32>
    %451 = arith.divf %449, %450 : vector<1x256xf32>
    %452 = vector.shape_cast %451 : vector<1x256xf32> to vector<1x1x256xf32>
    %453 = vector.broadcast %452 : vector<1x1x256xf32> to vector<1x4x256xf32>
    %454 = arith.mulf %0, %453 : vector<1x4x256xf32>
    %c0_39 = arith.constant 0 : index
    %c0_40 = arith.constant 0 : index
    %c0_41 = arith.constant 0 : index
    %455 = vector.load %arg4[%c0_39, %c0_40, %c0_41] : memref<1x4x256xf32, #tpu.memory_space<vmem>>, vector<1x4x256xf32>
    tpu.vector_store %arg4[%c0_39, %c0_40, %c0_41], %454 {strides = array<i32>} : memref<1x4x256xf32, #tpu.memory_space<vmem>>, vector<1x4x256xf32>,
    return
  }
  func.func @transform_0(%arg0: i32) -> i32 {
    %c0_i32 = arith.constant 0 : i32
    %c0_i32_0 = arith.constant 0 : i32
    return %c0_i32 : i32
  }
  func.func @transform_1(%arg0: i32) -> (i32, i32) {
    %c0_i32 = arith.constant 0 : i32
    %c0_i32_0 = arith.constant 0 : i32
    %c0_i32_1 = arith.constant 0 : i32
    return %c0_i32, %c0_i32_0 : i32, i32
  }
  func.func @transform_2(%arg0: i32) -> (i32, i32, i32) {
    %c0_i32 = arith.constant 0 : i32
    %c0_i32_0 = arith.constant 0 : i32
    %c0_i32_1 = arith.constant 0 : i32
    return %arg0, %c0_i32, %c0_i32_0 : i32, i32, i32
  }
  func.func @transform_3(%arg0: i32) -> (i32, i32, i32) {
    %c0_i32 = arith.constant 0 : i32
    %c0_i32_0 = arith.constant 0 : i32
    %c0_i32_1 = arith.constant 0 : i32
    return %arg0, %c0_i32, %c0_i32_0 : i32, i32, i32
  }
}

</mosaic_0001>

<llo_original>
// kernel: tpu_custom_call.1
$region0: #{tpu_custom_call.1}
  #allocation0 [shape = 'u32[]', space=smem, size = 0x4, offset = 0x4, fixed_abs, tag = 'smem constant byte address 0x4 - core index']
  #allocation1 [shape = 'u32[144,128]{1,0:T(1,128)}', space=vmem, size = 0x12000, scoped, tag = 'internal scratch']
  %s0 = inlined_call_operand.hbm [shape: f32[98], index: 0, kind: input, shape index: {}]
  %s1 = inlined_call_operand.hbm [shape: f32[14,256], index: 1, kind: input, shape index: {}]
  %s2 = inlined_call_operand.hbm [shape: f32[2,4,256], index: 2, kind: input, shape index: {}]
  %s3 = inlined_call_operand.hbm [shape: f32[2,4,256], index: 3, kind: output, shape index: {}]
  %s4 = sld [smem:[#allocation0]]
  $region57: #{tpu_custom_call.1} parent=0
    _
  %s6 = ssub.s32 1, %s4
  %s7 = scalar_select 0, %s6, %s4
  $region1: #{tpu_custom_call.1} parent=0
    #allocation2 [shape = 'u8[512]{0}', space=smem, size = 0x200, scoped, tag = 'input window, operand 0, single buffered']
    #allocation3 [shape = 's32[2]{0}', space=sflag, size = 0x8, scoped, tag = 'scoped memory for tpu_custom_call.1']
    #allocation4 [shape = 's32[2]{0}', space=sflag, size = 0x8, scoped, tag = 'scoped memory for tpu_custom_call.1']
    #allocation5 [shape = 's32[2]{0}', space=sflag, size = 0x8, scoped, tag = 'scoped memory for tpu_custom_call.1']
    #allocation6 [shape = 'u8[16384]{0}', space=vmem, size = 0x4000, scoped, tag = 'input window, operand 1, single buffered']
    #allocation7 [shape = 'u8[8192]{0}', space=vmem, size = 0x2000, scoped, tag = 'input window, operand 2']
    #allocation8 [shape = 's32[2]{0}', space=sflag, size = 0x8, scoped, tag = 'scoped memory for tpu_custom_call.1']
    #allocation9 [shape = 'u8[8192]{0}', space=vmem, size = 0x2000, scoped, tag = 'output window, operand 0']
    %8 = vsyncpa [#allocation5], 0
    %9 = vsyncpa [#allocation3], 0
    %10 = vsyncpa [#allocation8], 0
    %s11 = scalar_lea.sflag [#allocation8], 1
    %12 = vsyncpa %s11, 0
    %13 = vsyncpa [#allocation4], 0
    %s14 = scalar_lea.sflag [#allocation4], 1
    %15 = vsyncpa %s14, 0
    loop: start=0, step=1, limit=4
    $region2: #{tpu_custom_call.1} parent=1 // loop_pre_header
      _
    $region3: #{tpu_custom_call.1} parent=1 // loop_header
      %s17 = sphi 0, %s21
      %p18 = scmp.ge.s32.totalorder %s17, 4
      %s25 = sphi 0, %s25
      %s27 = sphi 0, %s25
      %s28 = sphi 0, %s27
      %s42 = sphi 0, %s28
      %s46 = sphi 0, %s46
      %s48 = sphi 0, %s46
      %s49 = sphi 0, %s48
      %s63 = sphi 0, %s49
      %s69 = sphi 0, %s71
      %s72 = sphi 0, %s69
      %s73 = sphi 0, %s72
      %s89 = sphi 0, %s73
      %s95 = sphi 0, %s97
      %s98 = sphi 0, %s95
      %s99 = sphi 0, %s98
      %s115 = sphi 0, %s99
    $region4: #{tpu_custom_call.1} parent=1 // loop_header_branch
      %20 = sbr.rel (%p18) target = $region8
    $region5: #{tpu_custom_call.1} parent=1 // loop_body
      %s22 = ssub.s32 %s17, 1
      %s23 = ssub.s32 %s17, 2
      %s24 = sadd.s32 %s17, 1
      %s26 = sadd.s32 %s25, 1
      %p29 = scmp.eq.s32.totalorder %s17, 1
      %p30 = scmp.ne.s32.totalorder %s25, %s27
      %p31 = scmp.eq.s32.totalorder %s17, 0
      %p32 = por %p30, %p31
      %p33 = scmp.ne.s32.totalorder %s25, %s27
      %p34 = scmp.eq.s32.totalorder %s22, 1
      %p35 = por %p33, %p34
      %p36 = scmp.ne.s32.totalorder %s27, %s28
      %p37 = scmp.eq.s32.totalorder %s22, 0
      %p38 = por %p36, %p37
      %p39 = scmp.ne.s32.totalorder %s27, %s28
      %p40 = scmp.eq.s32.totalorder %s23, 1
      %p41 = por %p39, %p40
      %p43 = scmp.ne.s32.totalorder %s28, %s42
      %p44 = scmp.eq.s32.totalorder %s23, 0
      %p45 = por %p43, %p44
      %s47 = sadd.s32 %s46, 1
      %p50 = scmp.eq.s32.totalorder %s17, 1
      %p51 = scmp.ne.s32.totalorder %s46, %s48
      %p52 = scmp.eq.s32.totalorder %s17, 0
      %p53 = por %p51, %p52
      %p54 = scmp.ne.s32.totalorder %s46, %s48
      %p55 = scmp.eq.s32.totalorder %s22, 1
      %p56 = por %p54, %p55
      %p57 = scmp.ne.s32.totalorder %s48, %s49
      %p58 = scmp.eq.s32.totalorder %s22, 0
      %p59 = por %p57, %p58
      %p60 = scmp.ne.s32.totalorder %s48, %s49
      %p61 = scmp.eq.s32.totalorder %s23, 1
      %p62 = por %p60, %p61
      %p64 = scmp.ne.s32.totalorder %s49, %s63
      %p65 = scmp.eq.s32.totalorder %s23, 0
      %p66 = por %p64, %p65
      %s67 = ssub.s32 %s17, %s24
      %p68 = scmp.eq.s32.totalorder %s67, 0
      %s70 = sadd.s32 %s69, 1
      %s71 = scalar_select %p68, %s69, %s70
      %p74 = pneg %p68
      %p75 = scmp.eq.s32.totalorder %s17, 1
      %p76 = por %p74, %p75
      %p77 = scmp.ne.s32.totalorder %s69, %s72
      %p78 = scmp.eq.s32.totalorder %s17, 0
      %p79 = por %p77, %p78
      %p80 = scmp.ne.s32.totalorder %s69, %s72
      %p81 = scmp.eq.s32.totalorder %s22, 1
      %p82 = por %p80, %p81
      %p83 = scmp.ne.s32.totalorder %s72, %s73
      %p84 = scmp.eq.s32.totalorder %s22, 0
      %p85 = por %p83, %p84
      %p86 = scmp.ne.s32.totalorder %s72, %s73
      %p87 = scmp.eq.s32.totalorder %s23, 1
      %p88 = por %p86, %p87
      %p90 = scmp.ne.s32.totalorder %s73, %s89
      %p91 = scmp.eq.s32.totalorder %s23, 0
      %p92 = por %p90, %p91
      %s93 = ssub.s32 %s17, %s24
      %p94 = scmp.eq.s32.totalorder %s93, 0
      %s96 = sadd.s32 %s95, 1
      %s97 = scalar_select %p94, %s95, %s96
      %p100 = pneg %p94
      %p101 = scmp.eq.s32.totalorder %s17, 1
      %p102 = por %p100, %p101
      %p103 = scmp.ne.s32.totalorder %s95, %s98
      %p104 = scmp.eq.s32.totalorder %s17, 0
      %p105 = por %p103, %p104
      %p106 = scmp.ne.s32.totalorder %s95, %s98
      %p107 = scmp.eq.s32.totalorder %s22, 1
      %p108 = por %p106, %p107
      %p109 = scmp.ne.s32.totalorder %s98, %s99
      %p110 = scmp.eq.s32.totalorder %s22, 0
      %p111 = por %p109, %p110
      %p112 = scmp.ne.s32.totalorder %s98, %s99
      %p113 = scmp.eq.s32.totalorder %s23, 1
      %p114 = por %p112, %p113
      %p116 = scmp.ne.s32.totalorder %s99, %s115
      %p117 = scmp.eq.s32.totalorder %s23, 0
      %p118 = por %p116, %p117
      %p119 = scmp.le.s32.totalorder 1, %s17
      %p120 = scmp.lt.s32.totalorder %s17, 3
      %p121 = pnand %p119, %p120
      %p122 = pneg %p121
      // Predicated region
      $region9: #{tpu_custom_call.1} parent=5 // pred_check
        _
      $region10: #{tpu_custom_call.1} parent=5 // pred_check_branch
        %124 = sbr.rel (%p121) target = $region12
      $region11: #{tpu_custom_call.1} parent=5 // pred_region
        %s125 = ssub.s32 %s17, 1
        // Predicated region
        $region13: #{tpu_custom_call.1} parent=11 // pred_check
          %p126 = pneg %p38
        $region14: #{tpu_custom_call.1} parent=11 // pred_check_branch
          %128 = sbr.rel (%p126) target = $region16
        $region15: #{tpu_custom_call.1} parent=11 // pred_region
          %s130 = ssub.s32 16, 16
          %131 = vsyncadd [#allocation5], %s130
          %134 = dma.hbm_to_smem %s0, 16, [#allocation2], [#allocation5]
        $region16: #{tpu_custom_call.1} parent=11 // pred_fallthru
          _
        // Predicated region
        $region17: #{tpu_custom_call.1} parent=11 // pred_check
          %p135 = pneg %p59
        $region18: #{tpu_custom_call.1} parent=11 // pred_check_branch
          %137 = sbr.rel (%p135) target = $region20
        $region19: #{tpu_custom_call.1} parent=11 // pred_region
          %s139 = ssub.s32 512, 512
          %140 = vsyncadd [#allocation3], %s139
          %s141 = sshll.u32 [#allocation6], 4
          %s142 = int_to_ptr.vmem [resolvable:$true] %s141
          %147 = dma.hbm_to_vmem [thread:$0]  %s1, 512, %s142, [#allocation3], 256, 256, 16
        $region20: #{tpu_custom_call.1} parent=11 // pred_fallthru
          _
      $region12: #{tpu_custom_call.1} parent=5 // pred_fallthru
        _
      %p148 = scmp.lt.s32.totalorder %s17, 2
      // Predicated region
      $region21: #{tpu_custom_call.1} parent=5 // pred_check
        %p149 = pneg %p148
      $region22: #{tpu_custom_call.1} parent=5 // pred_check_branch
        %151 = sbr.rel (%p149) target = $region24
      $region23: #{tpu_custom_call.1} parent=5 // pred_region
        // Predicated region
        $region25: #{tpu_custom_call.1} parent=23 // pred_check
          %p152 = pneg %p79
        $region26: #{tpu_custom_call.1} parent=23 // pred_check_branch
          %154 = sbr.rel (%p152) target = $region28
        $region27: #{tpu_custom_call.1} parent=23 // pred_region
          %s155 = sand.u32 %s69, 1
          %s156 = scalar_lea.sflag [#allocation8], %s155
          %s157 = sand.u32 %s69, 1
          %s158 = smul.addr %s157, 8
          %s159 = scalar_lea.vmem [#allocation7], %s158
          %s161 = ssub.s32 128, 128
          %162 = vsyncadd %s156, %s161
          %s163 = smul.addr %s17, 2
          %s164 = smul.addr %s163, 64
          %s165 = scalar_lea.hbm %s2, %s164
          %s167 = sshll.u32 %s159, 4
          %s168 = int_to_ptr.vmem [resolvable:$true] %s167
          %170 = dma.hbm_to_vmem [thread:$0]  %s165, 128, %s168, %s156
        $region28: #{tpu_custom_call.1} parent=23 // pred_fallthru
          _
      $region24: #{tpu_custom_call.1} parent=5 // pred_fallthru
        _
      %p171 = scmp.le.s32.totalorder 1, %s17
      %p172 = scmp.lt.s32.totalorder %s17, 3
      %p173 = pnand %p171, %p172
      %p174 = pneg %p173
      // Predicated region
      $region29: #{tpu_custom_call.1} parent=5 // pred_check
        _
      $region30: #{tpu_custom_call.1} parent=5 // pred_check_branch
        %176 = sbr.rel (%p173) target = $region32
      $region31: #{tpu_custom_call.1} parent=5 // pred_region
        %s177 = ssub.s32 %s17, 1
        // Predicated region
        $region33: #{tpu_custom_call.1} parent=31 // pred_check
          %p178 = pneg %p38
        $region34: #{tpu_custom_call.1} parent=31 // pred_check_branch
          %180 = sbr.rel (%p178) target = $region36
        $region35: #{tpu_custom_call.1} parent=31 // pred_region
          %181 = dma.done [#allocation5], 16
        $region36: #{tpu_custom_call.1} parent=31 // pred_fallthru
          _
        // Predicated region
        $region37: #{tpu_custom_call.1} parent=31 // pred_check
          %p182 = pneg %p59
        $region38: #{tpu_custom_call.1} parent=31 // pred_check_branch
          %184 = sbr.rel (%p182) target = $region40
        $region39: #{tpu_custom_call.1} parent=31 // pred_region
          %185 = dma.done [#allocation3], 512
        $region40: #{tpu_custom_call.1} parent=31 // pred_fallthru
          _
        %s186 = sand.u32 %s72, 1
        %s187 = scalar_lea.sflag [#allocation8], %s186
        %s188 = sand.u32 %s72, 1
        %s189 = smul.addr %s188, 8
        %s190 = scalar_lea.vmem [#allocation7], %s189
        // Predicated region
        $region41: #{tpu_custom_call.1} parent=31 // pred_check
          %p191 = pneg %p85
        $region42: #{tpu_custom_call.1} parent=31 // pred_check_branch
          %193 = sbr.rel (%p191) target = $region44
        $region43: #{tpu_custom_call.1} parent=31 // pred_region
          %194 = dma.done %s187, 128
        $region44: #{tpu_custom_call.1} parent=31 // pred_fallthru
          _
        %195 = sfence
        %p196 = pneg %p38
        %p197 = pneg %p35
        %p198 = pneg %p59
        %p199 = pneg %p56
        %s200 = sand.u32 %s72, 1
        %s201 = scalar_lea.sflag [#allocation8], %s200
        %s202 = sand.u32 %s72, 1
        %s203 = smul.addr %s202, 8
        %s204 = scalar_lea.vmem [#allocation7], %s203
        %p205 = pneg %p85
        %p206 = pneg %p82
        %p207 = pneg %p111
        %p208 = pneg %p108
        %s209 = sand.u32 %s98, 1
        %s210 = scalar_lea.sflag [#allocation4], %s209
        %s211 = sand.u32 %s98, 1
        %s212 = smul.addr %s211, 8
        %s213 = scalar_lea.vmem [#allocation9], %s212
        %v214 = vld [vmem:[%s190] sm:$0xff]
        %v216 = vcombine.high %v214, %v214
        %vm218 = vcmask 1043456
        %v219 = vsel %vm218, %v214, -inf
        %v220 = vrot.slane %v219, 4
        %v221 = vmax.f32 %v219, %v220
        %v222 = vrot.slane %v221, 2
        %v223 = vmax.f32 %v221, %v222
        %v224 = vrot.slane %v223, 1
        %v225 = vmax.f32 %v223, %v224
        %v226 = vsel %vm218, %v216, -inf
        %v227 = vrot.slane %v226, 4
        %v228 = vmax.f32 %v226, %v227
        %v229 = vrot.slane %v228, 2
        %v230 = vmax.f32 %v228, %v229
        %v231 = vrot.slane %v230, 1
        %v232 = vmax.f32 %v230, %v231
        %v233 = vsel %vm218, %v214, 0.0
        %v234 = vrot.slane %v233, 4
        %v235 = vadd.f32 %v233, %v234
        %v236 = vrot.slane %v235, 2
        %v237 = vadd.f32 %v235, %v236
        %v238 = vrot.slane %v237, 1
        %v239 = vadd.f32 %v237, %v238
        %v240 = vsel %vm218, %v216, 0.0
        %v241 = vrot.slane %v240, 4
        %v242 = vadd.f32 %v240, %v241
        %v243 = vrot.slane %v242, 2
        %v244 = vadd.f32 %v242, %v243
        %v245 = vrot.slane %v244, 1
        %v246 = vadd.f32 %v244, %v245
        %s247 = sld [smem:[#allocation2]]
        %s248 = sld [smem:[#allocation2 + $0x1]]
        %s249 = sld [smem:[#allocation2 + $0x2]]
        %s250 = sld [smem:[#allocation2 + $0x3]]
        %s251 = sld [smem:[#allocation2 + $0x4]]
        %s252 = sld [smem:[#allocation2 + $0x5]]
        %s253 = sld [smem:[#allocation2 + $0x6]]
        %s254 = sld [smem:[#allocation2 + $0x7]]
        %s255 = sld [smem:[#allocation2 + $0x8]]
        %s256 = sld [smem:[#allocation2 + $0x9]]
        %s257 = sld [smem:[#allocation2 + $0xa]]
        %s258 = sld [smem:[#allocation2 + $0xb]]
        %s259 = sld [smem:[#allocation2 + $0xc]]
        %s260 = sld [smem:[#allocation2 + $0xd]]
        %s261 = sld [smem:[#allocation2 + $0xe]]
        %s262 = sld [smem:[#allocation2 + $0xf]]
        %s263 = sld [smem:[#allocation2 + $0x10]]
        %s264 = sld [smem:[#allocation2 + $0x11]]
        %s265 = sld [smem:[#allocation2 + $0x12]]
        %s266 = sld [smem:[#allocation2 + $0x13]]
        %s267 = sld [smem:[#allocation2 + $0x14]]
        %s268 = sld [smem:[#allocation2 + $0x15]]
        %s269 = sld [smem:[#allocation2 + $0x16]]
        %s270 = sld [smem:[#allocation2 + $0x17]]
        %s271 = sld [smem:[#allocation2 + $0x18]]
        %s272 = sld [smem:[#allocation2 + $0x19]]
        %s273 = sld [smem:[#allocation2 + $0x1a]]
        %s274 = sld [smem:[#allocation2 + $0x1b]]
        %s275 = sld [smem:[#allocation2 + $0x1c]]
        %s276 = sld [smem:[#allocation2 + $0x1d]]
        %s277 = sld [smem:[#allocation2 + $0x1e]]
        %s278 = sld [smem:[#allocation2 + $0x1f]]
        %s279 = sld [smem:[#allocation2 + $0x20]]
        %s280 = sld [smem:[#allocation2 + $0x21]]
        %s281 = sld [smem:[#allocation2 + $0x22]]
        %s282 = sld [smem:[#allocation2 + $0x23]]
        %s283 = sld [smem:[#allocation2 + $0x24]]
        %s284 = sld [smem:[#allocation2 + $0x25]]
        %s285 = sld [smem:[#allocation2 + $0x26]]
        %s286 = sld [smem:[#allocation2 + $0x27]]
        %s287 = sld [smem:[#allocation2 + $0x28]]
        %s288 = sld [smem:[#allocation2 + $0x29]]
        %s289 = sld [smem:[#allocation2 + $0x2a]]
        %s290 = sld [smem:[#allocation2 + $0x2b]]
        %s291 = sld [smem:[#allocation2 + $0x2c]]
        %s292 = sld [smem:[#allocation2 + $0x2d]]
        %s293 = sld [smem:[#allocation2 + $0x2e]]
        %s294 = sld [smem:[#allocation2 + $0x2f]]
        %s295 = sld [smem:[#allocation2 + $0x30]]
        %s296 = sld [smem:[#allocation2 + $0x31]]
        %s297 = sld [smem:[#allocation2 + $0x32]]
        %s298 = sld [smem:[#allocation2 + $0x33]]
        %s299 = sld [smem:[#allocation2 + $0x34]]
        %s300 = sld [smem:[#allocation2 + $0x35]]
        %s301 = sld [smem:[#allocation2 + $0x36]]
        %s302 = sld [smem:[#allocation2 + $0x37]]
        %s303 = sld [smem:[#allocation2 + $0x38]]
        %s304 = sld [smem:[#allocation2 + $0x39]]
        %s305 = sld [smem:[#allocation2 + $0x3a]]
        %s306 = sld [smem:[#allocation2 + $0x3b]]
        %s307 = sld [smem:[#allocation2 + $0x3c]]
        %s308 = sld [smem:[#allocation2 + $0x3d]]
        %s309 = sld [smem:[#allocation2 + $0x3e]]
        %s310 = sld [smem:[#allocation2 + $0x3f]]
        %s311 = sld [smem:[#allocation2 + $0x40]]
        %s312 = sld [smem:[#allocation2 + $0x41]]
        %s313 = sld [smem:[#allocation2 + $0x42]]
        %s314 = sld [smem:[#allocation2 + $0x43]]
        %s315 = sld [smem:[#allocation2 + $0x44]]
        %s316 = sld [smem:[#allocation2 + $0x45]]
        %s317 = sld [smem:[#allocation2 + $0x46]]
        %s318 = sld [smem:[#allocation2 + $0x47]]
        %s319 = sld [smem:[#allocation2 + $0x48]]
        %s320 = sld [smem:[#allocation2 + $0x49]]
        %s321 = sld [smem:[#allocation2 + $0x4a]]
        %s322 = sld [smem:[#allocation2 + $0x4b]]
        %s323 = sld [smem:[#allocation2 + $0x4c]]
        %s324 = sld [smem:[#allocation2 + $0x4d]]
        %s325 = sld [smem:[#allocation2 + $0x4e]]
        %s326 = sld [smem:[#allocation2 + $0x4f]]
        %s327 = sld [smem:[#allocation2 + $0x50]]
        %s328 = sld [smem:[#allocation2 + $0x51]]
        %s329 = sld [smem:[#allocation2 + $0x52]]
        %s330 = sld [smem:[#allocation2 + $0x53]]
        %s331 = sld [smem:[#allocation2 + $0x54]]
        %s332 = sld [smem:[#allocation2 + $0x55]]
        %s333 = sld [smem:[#allocation2 + $0x56]]
        %s334 = sld [smem:[#allocation2 + $0x57]]
        %s335 = sld [smem:[#allocation2 + $0x58]]
        %s336 = sld [smem:[#allocation2 + $0x59]]
        %s337 = sld [smem:[#allocation2 + $0x5a]]
        %s338 = sld [smem:[#allocation2 + $0x5b]]
        %s339 = sld [smem:[#allocation2 + $0x5c]]
        %s340 = sld [smem:[#allocation2 + $0x5d]]
        %s341 = sld [smem:[#allocation2 + $0x5e]]
        %s342 = sld [smem:[#allocation2 + $0x5f]]
        %s343 = sld [smem:[#allocation2 + $0x60]]
        %s344 = sld [smem:[#allocation2 + $0x61]]
        %345 = vrot.lane.b32.xlu0 %v225, 48
        %v346 = vpop.permute.xlu0 %345
        %347 = vrot.lane.b32.xlu0 %v232, 48
        %v348 = vpop.permute.xlu0 %347
        %v349 = vlaneseq
        %v350 = vand.u32 %v349, 127
        %vm351 = vcmp.lt.s32.totalorder %v350, 48
        %v352 = vsel %vm351, %v346, %v348
        %v353 = vsel %vm351, %v348, %v346
        %354 = vrot.lane.b32.xlu0 %v239, 48
        %v355 = vpop.permute.xlu0 %354
        %356 = vrot.lane.b32.xlu0 %v246, 48
        %v357 = vpop.permute.xlu0 %356
        %v358 = vsel %vm351, %v355, %v357
        %v359 = vsel %vm351, %v357, %v355
        %v360 = vld [vmem:[#allocation6] ss:$8 sm:$0x3]
        %v362 = vlaneseq
        %v363 = vshrl.u32 %v362, 7
        %v364 = vsub.s32 0, %v363
        %v365 = vrot.slane %v360, %v364
        %v366 = vlaneseq
        %v367 = vshrl.u32 %v366, 7
        %v368 = vsub.s32 1, %v367
        %v369 = vrot.slane %v360, %v368
        %v372 = vmul.f32 %v353, %v365
        %v373 = vmul.f32 %v352, %v369
        %v374 = vmul.f32 %v359, %v365
        %v375 = vmul.f32 %v358, %v369
        %376 = vrot.lane.b32.xlu0 %v225, 32
        %v377 = vpop.permute.xlu0 %376
        %378 = vrot.lane.b32.xlu0 %v232, 32
        %v379 = vpop.permute.xlu0 %378
        %vm380 = vcmp.lt.s32.totalorder %v350, 32
        %v381 = vsel %vm380, %v377, %v379
        %v382 = vsel %vm380, %v379, %v377
        %383 = vrot.lane.b32.xlu0 %v239, 32
        %v384 = vpop.permute.xlu0 %383
        %385 = vrot.lane.b32.xlu0 %v246, 32
        %v386 = vpop.permute.xlu0 %385
        %v387 = vsel %vm380, %v384, %v386
        %v388 = vsel %vm380, %v386, %v384
        %s389 = scalar_lea.vmem [#allocation6], 1
        %v390 = vld [vmem:[%s389] ss:$8 sm:$0x3]
        %v392 = vlaneseq
        %v393 = vshrl.u32 %v392, 7
        %v394 = vsub.s32 0, %v393
        %v395 = vrot.slane %v390, %v394
        %v396 = vlaneseq
        %v397 = vshrl.u32 %v396, 7
        %v398 = vsub.s32 1, %v397
        %v399 = vrot.slane %v390, %v398
        %v402 = vmul.f32 %v382, %v395
        %v403 = vmul.f32 %v381, %v399
        %v404 = vmul.f32 %v388, %v395
        %v405 = vmul.f32 %v387, %v399
        %406 = vrot.lane.b32.xlu0 %v225, 16
        %v407 = vpop.permute.xlu0 %406
        %408 = vrot.lane.b32.xlu0 %v232, 16
        %v409 = vpop.permute.xlu0 %408
        %vm410 = vcmp.lt.s32.totalorder %v350, 16
        %v411 = vsel %vm410, %v407, %v409
        %v412 = vsel %vm410, %v409, %v407
        %413 = vrot.lane.b32.xlu0 %v239, 16
        %v414 = vpop.permute.xlu0 %413
        %415 = vrot.lane.b32.xlu0 %v246, 16
        %v416 = vpop.permute.xlu0 %415
        %v417 = vsel %vm410, %v414, %v416
        %v418 = vsel %vm410, %v416, %v414
        %s419 = scalar_lea.vmem [#allocation6], 2
        %v420 = vld [vmem:[%s419] ss:$8 sm:$0x3]
        %v422 = vlaneseq
        %v423 = vshrl.u32 %v422, 7
        %v424 = vsub.s32 0, %v423
        %v425 = vrot.slane %v420, %v424
        %v426 = vlaneseq
        %v427 = vshrl.u32 %v426, 7
        %v428 = vsub.s32 1, %v427
        %v429 = vrot.slane %v420, %v428
        %v432 = vmul.f32 %v412, %v425
        %v433 = vmul.f32 %v411, %v429
        %v434 = vmul.f32 %v418, %v425
        %v435 = vmul.f32 %v417, %v429
        %s436 = scalar_lea.vmem [#allocation6], 3
        %v437 = vld [vmem:[%s436] ss:$8 sm:$0x3]
        %v439 = vlaneseq
        %v440 = vshrl.u32 %v439, 7
        %v441 = vsub.s32 0, %v440
        %v442 = vrot.slane %v437, %v441
        %v443 = vlaneseq
        %v444 = vshrl.u32 %v443, 7
        %v445 = vsub.s32 1, %v444
        %v446 = vrot.slane %v437, %v445
        %v449 = vmul.f32 %v225, %v442
        %v450 = vmul.f32 %v232, %v446
        %v451 = vmul.f32 %v239, %v442
        %v452 = vmul.f32 %v246, %v446
        %453 = vrot.lane.b32.xlu0 %v225, 112
        %v454 = vpop.permute.xlu0 %453
        %455 = vrot.lane.b32.xlu0 %v232, 112
        %v456 = vpop.permute.xlu0 %455
        %vm457 = vcmp.lt.s32.totalorder %v350, 112
        %v458 = vsel %vm457, %v454, %v456
        %v459 = vsel %vm457, %v456, %v454
        %460 = vrot.lane.b32.xlu0 %v239, 112
        %v461 = vpop.permute.xlu0 %460
        %462 = vrot.lane.b32.xlu0 %v246, 112
        %v463 = vpop.permute.xlu0 %462
        %v464 = vsel %vm457, %v461, %v463
        %v465 = vsel %vm457, %v463, %v461
        %s466 = scalar_lea.vmem [#allocation6], 4
        %v467 = vld [vmem:[%s466] ss:$8 sm:$0x3]
        %v469 = vlaneseq
        %v470 = vshrl.u32 %v469, 7
        %v471 = vsub.s32 0, %v470
        %v472 = vrot.slane %v467, %v471
        %v473 = vlaneseq
        %v474 = vshrl.u32 %v473, 7
        %v475 = vsub.s32 1, %v474
        %v476 = vrot.slane %v467, %v475
        %v479 = vmul.f32 %v458, %v472
        %v480 = vmul.f32 %v459, %v476
        %v481 = vmul.f32 %v464, %v472
        %v482 = vmul.f32 %v465, %v476
        %483 = vrot.lane.b32.xlu0 %v225, 96
        %v484 = vpop.permute.xlu0 %483
        %485 = vrot.lane.b32.xlu0 %v232, 96
        %v486 = vpop.permute.xlu0 %485
        %vm487 = vcmp.lt.s32.totalorder %v350, 96
        %v488 = vsel %vm487, %v484, %v486
        %v489 = vsel %vm487, %v486, %v484
        %490 = vrot.lane.b32.xlu0 %v239, 96
        %v491 = vpop.permute.xlu0 %490
        %492 = vrot.lane.b32.xlu0 %v246, 96
        %v493 = vpop.permute.xlu0 %492
        %v494 = vsel %vm487, %v491, %v493
        %v495 = vsel %vm487, %v493, %v491
        %s496 = scalar_lea.vmem [#allocation6], 5
        %v497 = vld [vmem:[%s496] ss:$8 sm:$0x3]
        %v499 = vlaneseq
        %v500 = vshrl.u32 %v499, 7
        %v501 = vsub.s32 0, %v500
        %v502 = vrot.slane %v497, %v501
        %v503 = vlaneseq
        %v504 = vshrl.u32 %v503, 7
        %v505 = vsub.s32 1, %v504
        %v506 = vrot.slane %v497, %v505
        %v509 = vmul.f32 %v488, %v502
        %v510 = vmul.f32 %v489, %v506
        %v511 = vmul.f32 %v494, %v502
        %v512 = vmul.f32 %v495, %v506
        %513 = vrot.lane.b32.xlu0 %v225, 80
        %v514 = vpop.permute.xlu0 %513
        %515 = vrot.lane.b32.xlu0 %v232, 80
        %v516 = vpop.permute.xlu0 %515
        %vm517 = vcmp.lt.s32.totalorder %v350, 80
        %v518 = vsel %vm517, %v514, %v516
        %v519 = vsel %vm517, %v516, %v514
        %520 = vrot.lane.b32.xlu0 %v239, 80
        %v521 = vpop.permute.xlu0 %520
        %522 = vrot.lane.b32.xlu0 %v246, 80
        %v523 = vpop.permute.xlu0 %522
        %v524 = vsel %vm517, %v521, %v523
        %v525 = vsel %vm517, %v523, %v521
        %s526 = scalar_lea.vmem [#allocation6], 6
        %v527 = vld [vmem:[%s526] ss:$8 sm:$0x3]
        %v529 = vlaneseq
        %v530 = vshrl.u32 %v529, 7
        %v531 = vsub.s32 0, %v530
        %v532 = vrot.slane %v527, %v531
        %v533 = vlaneseq
        %v534 = vshrl.u32 %v533, 7
        %v535 = vsub.s32 1, %v534
        %v536 = vrot.slane %v527, %v535
        %v539 = vmul.f32 %v518, %v532
        %v540 = vmul.f32 %v519, %v536
        %v541 = vmul.f32 %v524, %v532
        %v542 = vmul.f32 %v525, %v536
        %v543 = vstv %s247
        %v544 = vmul.f32 %v543, %v372
        %v545 = vmul.f32 %v543, %v373
        %v546 = vstv %s296
        %v547 = vmul.f32 %v546, %v374
        %v548 = vmul.f32 %v546, %v375
        %v549 = vadd.f32 %v544, %v547
        %v550 = vadd.f32 %v545, %v548
        %v551 = vstv %s254
        %v552 = vmul.f32 %v551, %v402
        %v553 = vmul.f32 %v551, %v403
        %v554 = vadd.f32 %v549, %v552
        %v555 = vadd.f32 %v550, %v553
        %v556 = vstv %s303
        %v557 = vmul.f32 %v556, %v404
        %v558 = vmul.f32 %v556, %v405
        %v559 = vadd.f32 %v554, %v557
        %v560 = vadd.f32 %v555, %v558
        %v561 = vstv %s261
        %v562 = vmul.f32 %v561, %v432
        %v563 = vmul.f32 %v561, %v433
        %v564 = vadd.f32 %v559, %v562
        %v565 = vadd.f32 %v560, %v563
        %v566 = vstv %s310
        %v567 = vmul.f32 %v566, %v434
        %v568 = vmul.f32 %v566, %v435
        %v569 = vadd.f32 %v564, %v567
        %v570 = vadd.f32 %v565, %v568
        %v571 = vstv %s268
        %v572 = vmul.f32 %v571, %v449
        %v573 = vmul.f32 %v571, %v450
        %v574 = vadd.f32 %v569, %v572
        %v575 = vadd.f32 %v570, %v573
        %v576 = vstv %s317
        %v577 = vmul.f32 %v576, %v451
        %v578 = vmul.f32 %v576, %v452
        %v579 = vadd.f32 %v574, %v577
        %v580 = vadd.f32 %v575, %v578
        %v581 = vstv %s275
        %v582 = vmul.f32 %v581, %v479
        %v583 = vmul.f32 %v581, %v480
        %v584 = vadd.f32 %v579, %v582
        %v585 = vadd.f32 %v580, %v583
        %v586 = vstv %s324
        %v587 = vmul.f32 %v586, %v481
        %v588 = vmul.f32 %v586, %v482
        %v589 = vadd.f32 %v584, %v587
        %v590 = vadd.f32 %v585, %v588
        %v591 = vstv %s282
        %v592 = vmul.f32 %v591, %v509
        %v593 = vmul.f32 %v591, %v510
        %v594 = vadd.f32 %v589, %v592
        %v595 = vadd.f32 %v590, %v593
        %v596 = vstv %s331
        %v597 = vmul.f32 %v596, %v511
        %v598 = vmul.f32 %v596, %v512
        %v599 = vadd.f32 %v594, %v597
        %v600 = vadd.f32 %v595, %v598
        %v601 = vstv %s289
        %v602 = vmul.f32 %v601, %v539
        %v603 = vmul.f32 %v601, %v540
        %v604 = vadd.f32 %v599, %v602
        %v605 = vadd.f32 %v600, %v603
        %v606 = vstv %s338
        %v607 = vmul.f32 %v606, %v541
        %v608 = vmul.f32 %v606, %v542
        %v609 = vadd.f32 %v604, %v607
        %v610 = vadd.f32 %v605, %v608
        %611 = vrot.lane.b32.xlu0 %v609, 3
        %v612 = vpop.permute.xlu0 %611
        %613 = vrot.lane.b32.xlu0 %v610, 3
        %v614 = vpop.permute.xlu0 %613
        %vm615 = vcmp.lt.s32.totalorder %v350, 3
        %v616 = vsel %vm615, %v612, %v614
        %v617 = vsel %vm615, %v614, %v612
        %s618 = scalar_lea.vmem [#allocation6], 7
        %v619 = vld [vmem:[%s618] ss:$8 sm:$0x3]
        %v621 = vlaneseq
        %v622 = vshrl.u32 %v621, 7
        %v623 = vsub.s32 0, %v622
        %v624 = vrot.slane %v619, %v623
        %v625 = vlaneseq
        %v626 = vshrl.u32 %v625, 7
        %v627 = vsub.s32 1, %v626
        %v628 = vrot.slane %v619, %v627
        %v631 = vmul.f32 %v617, %v624
        %v632 = vmul.f32 %v616, %v628
        %v633 = vstv %s248
        %v634 = vmul.f32 %v633, %v372
        %v635 = vmul.f32 %v633, %v373
        %v636 = vstv %s297
        %v637 = vmul.f32 %v636, %v374
        %v638 = vmul.f32 %v636, %v375
        %v639 = vadd.f32 %v634, %v637
        %v640 = vadd.f32 %v635, %v638
        %v641 = vstv %s255
        %v642 = vmul.f32 %v641, %v402
        %v643 = vmul.f32 %v641, %v403
        %v644 = vadd.f32 %v639, %v642
        %v645 = vadd.f32 %v640, %v643
        %v646 = vstv %s304
        %v647 = vmul.f32 %v646, %v404
        %v648 = vmul.f32 %v646, %v405
        %v649 = vadd.f32 %v644, %v647
        %v650 = vadd.f32 %v645, %v648
        %v651 = vstv %s262
        %v652 = vmul.f32 %v651, %v432
        %v653 = vmul.f32 %v651, %v433
        %v654 = vadd.f32 %v649, %v652
        %v655 = vadd.f32 %v650, %v653
        %v656 = vstv %s311
        %v657 = vmul.f32 %v656, %v434
        %v658 = vmul.f32 %v656, %v435
        %v659 = vadd.f32 %v654, %v657
        %v660 = vadd.f32 %v655, %v658
        %v661 = vstv %s269
        %v662 = vmul.f32 %v661, %v449
        %v663 = vmul.f32 %v661, %v450
        %v664 = vadd.f32 %v659, %v662
        %v665 = vadd.f32 %v660, %v663
        %v666 = vstv %s318
        %v667 = vmul.f32 %v666, %v451
        %v668 = vmul.f32 %v666, %v452
        %v669 = vadd.f32 %v664, %v667
        %v670 = vadd.f32 %v665, %v668
        %v671 = vstv %s276
        %v672 = vmul.f32 %v671, %v479
        %v673 = vmul.f32 %v671, %v480
        %v674 = vadd.f32 %v669, %v672
        %v675 = vadd.f32 %v670, %v673
        %v676 = vstv %s325
        %v677 = vmul.f32 %v676, %v481
        %v678 = vmul.f32 %v676, %v482
        %v679 = vadd.f32 %v674, %v677
        %v680 = vadd.f32 %v675, %v678
        %v681 = vstv %s283
        %v682 = vmul.f32 %v681, %v509
        %v683 = vmul.f32 %v681, %v510
        %v684 = vadd.f32 %v679, %v682
        %v685 = vadd.f32 %v680, %v683
        %v686 = vstv %s332
        %v687 = vmul.f32 %v686, %v511
        %v688 = vmul.f32 %v686, %v512
        %v689 = vadd.f32 %v684, %v687
        %v690 = vadd.f32 %v685, %v688
        %v691 = vstv %s290
        %v692 = vmul.f32 %v691, %v539
        %v693 = vmul.f32 %v691, %v540
        %v694 = vadd.f32 %v689, %v692
        %v695 = vadd.f32 %v690, %v693
        %v696 = vstv %s339
        %v697 = vmul.f32 %v696, %v541
        %v698 = vmul.f32 %v696, %v542
        %v699 = vadd.f32 %v694, %v697
        %v700 = vadd.f32 %v695, %v698
        %701 = vrot.lane.b32.xlu0 %v699, 2
        %v702 = vpop.permute.xlu0 %701
        %703 = vrot.lane.b32.xlu0 %v700, 2
        %v704 = vpop.permute.xlu0 %703
        %vm705 = vcmp.lt.s32.totalorder %v350, 2
        %v706 = vsel %vm705, %v702, %v704
        %v707 = vsel %vm705, %v704, %v702
        %s708 = scalar_lea.vmem [#allocation6], 16
        %v709 = vld [vmem:[%s708] ss:$8 sm:$0x3]
        %v711 = vlaneseq
        %v712 = vshrl.u32 %v711, 7
        %v713 = vsub.s32 0, %v712
        %v714 = vrot.slane %v709, %v713
        %v715 = vlaneseq
        %v716 = vshrl.u32 %v715, 7
        %v717 = vsub.s32 1, %v716
        %v718 = vrot.slane %v709, %v717
        %v721 = vmul.f32 %v707, %v714
        %v722 = vmul.f32 %v706, %v718
        %v723 = vadd.f32 %v631, %v721
        %v724 = vadd.f32 %v632, %v722
        %v725 = vstv %s249
        %v726 = vmul.f32 %v725, %v372
        %v727 = vmul.f32 %v725, %v373
        %v728 = vstv %s298
        %v729 = vmul.f32 %v728, %v374
        %v730 = vmul.f32 %v728, %v375
        %v731 = vadd.f32 %v726, %v729
        %v732 = vadd.f32 %v727, %v730
        %v733 = vstv %s256
        %v734 = vmul.f32 %v733, %v402
        %v735 = vmul.f32 %v733, %v403
        %v736 = vadd.f32 %v731, %v734
        %v737 = vadd.f32 %v732, %v735
        %v738 = vstv %s305
        %v739 = vmul.f32 %v738, %v404
        %v740 = vmul.f32 %v738, %v405
        %v741 = vadd.f32 %v736, %v739
        %v742 = vadd.f32 %v737, %v740
        %v743 = vstv %s263
        %v744 = vmul.f32 %v743, %v432
        %v745 = vmul.f32 %v743, %v433
        %v746 = vadd.f32 %v741, %v744
        %v747 = vadd.f32 %v742, %v745
        %v748 = vstv %s312
        %v749 = vmul.f32 %v748, %v434
        %v750 = vmul.f32 %v748, %v435
        %v751 = vadd.f32 %v746, %v749
        %v752 = vadd.f32 %v747, %v750
        %v753 = vstv %s270
        %v754 = vmul.f32 %v753, %v449
        %v755 = vmul.f32 %v753, %v450
        %v756 = vadd.f32 %v751, %v754
        %v757 = vadd.f32 %v752, %v755
        %v758 = vstv %s319
        %v759 = vmul.f32 %v758, %v451
        %v760 = vmul.f32 %v758, %v452
        %v761 = vadd.f32 %v756, %v759
        %v762 = vadd.f32 %v757, %v760
        %v763 = vstv %s277
        %v764 = vmul.f32 %v763, %v479
        %v765 = vmul.f32 %v763, %v480
        %v766 = vadd.f32 %v761, %v764
        %v767 = vadd.f32 %v762, %v765
        %v768 = vstv %s326
        %v769 = vmul.f32 %v768, %v481
        %v770 = vmul.f32 %v768, %v482
        %v771 = vadd.f32 %v766, %v769
        %v772 = vadd.f32 %v767, %v770
        %v773 = vstv %s284
        %v774 = vmul.f32 %v773, %v509
        %v775 = vmul.f32 %v773, %v510
        %v776 = vadd.f32 %v771, %v774
        %v777 = vadd.f32 %v772, %v775
        %v778 = vstv %s333
        %v779 = vmul.f32 %v778, %v511
        %v780 = vmul.f32 %v778, %v512
        %v781 = vadd.f32 %v776, %v779
        %v782 = vadd.f32 %v777, %v780
        %v783 = vstv %s291
        %v784 = vmul.f32 %v783, %v539
        %v785 = vmul.f32 %v783, %v540
        %v786 = vadd.f32 %v781, %v784
        %v787 = vadd.f32 %v782, %v785
        %v788 = vstv %s340
        %v789 = vmul.f32 %v788, %v541
        %v790 = vmul.f32 %v788, %v542
        %v791 = vadd.f32 %v786, %v789
        %v792 = vadd.f32 %v787, %v790
        %793 = vrot.lane.b32.xlu0 %v791, 1
        %v794 = vpop.permute.xlu0 %793
        %795 = vrot.lane.b32.xlu0 %v792, 1
        %v796 = vpop.permute.xlu0 %795
        %vm797 = vcmp.lt.s32.totalorder %v350, 1
        %v798 = vsel %vm797, %v794, %v796
        %v799 = vsel %vm797, %v796, %v794
        %s800 = scalar_lea.vmem [#allocation6], 17
        %v801 = vld [vmem:[%s800] ss:$8 sm:$0x3]
        %v803 = vlaneseq
        %v804 = vshrl.u32 %v803, 7
        %v805 = vsub.s32 0, %v804
        %v806 = vrot.slane %v801, %v805
        %v807 = vlaneseq
        %v808 = vshrl.u32 %v807, 7
        %v809 = vsub.s32 1, %v808
        %v810 = vrot.slane %v801, %v809
        %v813 = vmul.f32 %v799, %v806
        %v814 = vmul.f32 %v798, %v810
        %v815 = vadd.f32 %v723, %v813
        %v816 = vadd.f32 %v724, %v814
        %v817 = vstv %s250
        %v818 = vmul.f32 %v817, %v372
        %v819 = vmul.f32 %v817, %v373
        %v820 = vstv %s299
        %v821 = vmul.f32 %v820, %v374
        %v822 = vmul.f32 %v820, %v375
        %v823 = vadd.f32 %v818, %v821
        %v824 = vadd.f32 %v819, %v822
        %v825 = vstv %s257
        %v826 = vmul.f32 %v825, %v402
        %v827 = vmul.f32 %v825, %v403
        %v828 = vadd.f32 %v823, %v826
        %v829 = vadd.f32 %v824, %v827
        %v830 = vstv %s306
        %v831 = vmul.f32 %v830, %v404
        %v832 = vmul.f32 %v830, %v405
        %v833 = vadd.f32 %v828, %v831
        %v834 = vadd.f32 %v829, %v832
        %v835 = vstv %s264
        %v836 = vmul.f32 %v835, %v432
        %v837 = vmul.f32 %v835, %v433
        %v838 = vadd.f32 %v833, %v836
        %v839 = vadd.f32 %v834, %v837
        %v840 = vstv %s313
        %v841 = vmul.f32 %v840, %v434
        %v842 = vmul.f32 %v840, %v435
        %v843 = vadd.f32 %v838, %v841
        %v844 = vadd.f32 %v839, %v842
        %v845 = vstv %s271
        %v846 = vmul.f32 %v845, %v449
        %v847 = vmul.f32 %v845, %v450
        %v848 = vadd.f32 %v843, %v846
        %v849 = vadd.f32 %v844, %v847
        %v850 = vstv %s320
        %v851 = vmul.f32 %v850, %v451
        %v852 = vmul.f32 %v850, %v452
        %v853 = vadd.f32 %v848, %v851
        %v854 = vadd.f32 %v849, %v852
        %v855 = vstv %s278
        %v856 = vmul.f32 %v855, %v479
        %v857 = vmul.f32 %v855, %v480
        %v858 = vadd.f32 %v853, %v856
        %v859 = vadd.f32 %v854, %v857
        %v860 = vstv %s327
        %v861 = vmul.f32 %v860, %v481
        %v862 = vmul.f32 %v860, %v482
        %v863 = vadd.f32 %v858, %v861
        %v864 = vadd.f32 %v859, %v862
        %v865 = vstv %s285
        %v866 = vmul.f32 %v865, %v509
        %v867 = vmul.f32 %v865, %v510
        %v868 = vadd.f32 %v863, %v866
        %v869 = vadd.f32 %v864, %v867
        %v870 = vstv %s334
        %v871 = vmul.f32 %v870, %v511
        %v872 = vmul.f32 %v870, %v512
        %v873 = vadd.f32 %v868, %v871
        %v874 = vadd.f32 %v869, %v872
        %v875 = vstv %s292
        %v876 = vmul.f32 %v875, %v539
        %v877 = vmul.f32 %v875, %v540
        %v878 = vadd.f32 %v873, %v876
        %v879 = vadd.f32 %v874, %v877
        %v880 = vstv %s341
        %v881 = vmul.f32 %v880, %v541
        %v882 = vmul.f32 %v880, %v542
        %v883 = vadd.f32 %v878, %v881
        %v884 = vadd.f32 %v879, %v882
        %s885 = scalar_lea.vmem [#allocation6], 18
        %v886 = vld [vmem:[%s885] ss:$8 sm:$0x3]
        %v888 = vlaneseq
        %v889 = vshrl.u32 %v888, 7
        %v890 = vsub.s32 0, %v889
        %v891 = vrot.slane %v886, %v890
        %v892 = vlaneseq
        %v893 = vshrl.u32 %v892, 7
        %v894 = vsub.s32 1, %v893
        %v895 = vrot.slane %v886, %v894
        %v898 = vmul.f32 %v883, %v891
        %v899 = vmul.f32 %v884, %v895
        %v900 = vadd.f32 %v815, %v898
        %v901 = vadd.f32 %v816, %v899
        %v902 = vstv %s251
        %v903 = vmul.f32 %v902, %v372
        %v904 = vmul.f32 %v902, %v373
        %v905 = vstv %s300
        %v906 = vmul.f32 %v905, %v374
        %v907 = vmul.f32 %v905, %v375
        %v908 = vadd.f32 %v903, %v906
        %v909 = vadd.f32 %v904, %v907
        %v910 = vstv %s258
        %v911 = vmul.f32 %v910, %v402
        %v912 = vmul.f32 %v910, %v403
        %v913 = vadd.f32 %v908, %v911
        %v914 = vadd.f32 %v909, %v912
        %v915 = vstv %s307
        %v916 = vmul.f32 %v915, %v404
        %v917 = vmul.f32 %v915, %v405
        %v918 = vadd.f32 %v913, %v916
        %v919 = vadd.f32 %v914, %v917
        %v920 = vstv %s265
        %v921 = vmul.f32 %v920, %v432
        %v922 = vmul.f32 %v920, %v433
        %v923 = vadd.f32 %v918, %v921
        %v924 = vadd.f32 %v919, %v922
        %v925 = vstv %s314
        %v926 = vmul.f32 %v925, %v434
        %v927 = vmul.f32 %v925, %v435
        %v928 = vadd.f32 %v923, %v926
        %v929 = vadd.f32 %v924, %v927
        %v930 = vstv %s272
        %v931 = vmul.f32 %v930, %v449
        %v932 = vmul.f32 %v930, %v450
        %v933 = vadd.f32 %v928, %v931
        %v934 = vadd.f32 %v929, %v932
        %v935 = vstv %s321
        %v936 = vmul.f32 %v935, %v451
        %v937 = vmul.f32 %v935, %v452
        %v938 = vadd.f32 %v933, %v936
        %v939 = vadd.f32 %v934, %v937
        %v940 = vstv %s279
        %v941 = vmul.f32 %v940, %v479
        %v942 = vmul.f32 %v940, %v480
        %v943 = vadd.f32 %v938, %v941
        %v944 = vadd.f32 %v939, %v942
        %v945 = vstv %s328
        %v946 = vmul.f32 %v945, %v481
        %v947 = vmul.f32 %v945, %v482
        %v948 = vadd.f32 %v943, %v946
        %v949 = vadd.f32 %v944, %v947
        %v950 = vstv %s286
        %v951 = vmul.f32 %v950, %v509
        %v952 = vmul.f32 %v950, %v510
        %v953 = vadd.f32 %v948, %v951
        %v954 = vadd.f32 %v949, %v952
        %v955 = vstv %s335
        %v956 = vmul.f32 %v955, %v511
        %v957 = vmul.f32 %v955, %v512
        %v958 = vadd.f32 %v953, %v956
        %v959 = vadd.f32 %v954, %v957
        %v960 = vstv %s293
        %v961 = vmul.f32 %v960, %v539
        %v962 = vmul.f32 %v960, %v540
        %v963 = vadd.f32 %v958, %v961
        %v964 = vadd.f32 %v959, %v962
        %v965 = vstv %s342
        %v966 = vmul.f32 %v965, %v541
        %v967 = vmul.f32 %v965, %v542
        %v968 = vadd.f32 %v963, %v966
        %v969 = vadd.f32 %v964, %v967
        %970 = vrot.lane.b32.xlu0 %v968, 127
        %v971 = vpop.permute.xlu0 %970
        %972 = vrot.lane.b32.xlu0 %v969, 127
        %v973 = vpop.permute.xlu0 %972
        %vm974 = vcmp.lt.s32.totalorder %v350, 127
        %v975 = vsel %vm974, %v971, %v973
        %v976 = vsel %vm974, %v973, %v971
        %s977 = scalar_lea.vmem [#allocation6], 19
        %v978 = vld [vmem:[%s977] ss:$8 sm:$0x3]
        %v980 = vlaneseq
        %v981 = vshrl.u32 %v980, 7
        %v982 = vsub.s32 0, %v981
        %v983 = vrot.slane %v978, %v982
        %v984 = vlaneseq
        %v985 = vshrl.u32 %v984, 7
        %v986 = vsub.s32 1, %v985
        %v987 = vrot.slane %v978, %v986
        %v990 = vmul.f32 %v975, %v983
        %v991 = vmul.f32 %v976, %v987
        %v992 = vadd.f32 %v900, %v990
        %v993 = vadd.f32 %v901, %v991
        %v994 = vstv %s252
        %v995 = vmul.f32 %v994, %v372
        %v996 = vmul.f32 %v994, %v373
        %v997 = vstv %s301
        %v998 = vmul.f32 %v997, %v374
        %v999 = vmul.f32 %v997, %v375
        %v1000 = vadd.f32 %v995, %v998
        %v1001 = vadd.f32 %v996, %v999
        %v1002 = vstv %s259
        %v1003 = vmul.f32 %v1002, %v402
        %v1004 = vmul.f32 %v1002, %v403
        %v1005 = vadd.f32 %v1000, %v1003
        %v1006 = vadd.f32 %v1001, %v1004
        %v1007 = vstv %s308
        %v1008 = vmul.f32 %v1007, %v404
        %v1009 = vmul.f32 %v1007, %v405
        %v1010 = vadd.f32 %v1005, %v1008
        %v1011 = vadd.f32 %v1006, %v1009
        %v1012 = vstv %s266
        %v1013 = vmul.f32 %v1012, %v432
        %v1014 = vmul.f32 %v1012, %v433
        %v1015 = vadd.f32 %v1010, %v1013
        %v1016 = vadd.f32 %v1011, %v1014
        %v1017 = vstv %s315
        %v1018 = vmul.f32 %v1017, %v434
        %v1019 = vmul.f32 %v1017, %v435
        %v1020 = vadd.f32 %v1015, %v1018
        %v1021 = vadd.f32 %v1016, %v1019
        %v1022 = vstv %s273
        %v1023 = vmul.f32 %v1022, %v449
        %v1024 = vmul.f32 %v1022, %v450
        %v1025 = vadd.f32 %v1020, %v1023
        %v1026 = vadd.f32 %v1021, %v1024
        %v1027 = vstv %s322
        %v1028 = vmul.f32 %v1027, %v451
        %v1029 = vmul.f32 %v1027, %v452
        %v1030 = vadd.f32 %v1025, %v1028
        %v1031 = vadd.f32 %v1026, %v1029
        %v1032 = vstv %s280
        %v1033 = vmul.f32 %v1032, %v479
        %v1034 = vmul.f32 %v1032, %v480
        %v1035 = vadd.f32 %v1030, %v1033
        %v1036 = vadd.f32 %v1031, %v1034
        %v1037 = vstv %s329
        %v1038 = vmul.f32 %v1037, %v481
        %v1039 = vmul.f32 %v1037, %v482
        %v1040 = vadd.f32 %v1035, %v1038
        %v1041 = vadd.f32 %v1036, %v1039
        %v1042 = vstv %s287
        %v1043 = vmul.f32 %v1042, %v509
        %v1044 = vmul.f32 %v1042, %v510
        %v1045 = vadd.f32 %v1040, %v1043
        %v1046 = vadd.f32 %v1041, %v1044
        %v1047 = vstv %s336
        %v1048 = vmul.f32 %v1047, %v511
        %v1049 = vmul.f32 %v1047, %v512
        %v1050 = vadd.f32 %v1045, %v1048
        %v1051 = vadd.f32 %v1046, %v1049
        %v1052 = vstv %s294
        %v1053 = vmul.f32 %v1052, %v539
        %v1054 = vmul.f32 %v1052, %v540
        %v1055 = vadd.f32 %v1050, %v1053
        %v1056 = vadd.f32 %v1051, %v1054
        %v1057 = vstv %s343
        %v1058 = vmul.f32 %v1057, %v541
        %v1059 = vmul.f32 %v1057, %v542
        %v1060 = vadd.f32 %v1055, %v1058
        %v1061 = vadd.f32 %v1056, %v1059
        %1062 = vrot.lane.b32.xlu0 %v1060, 126
        %v1063 = vpop.permute.xlu0 %1062
        %1064 = vrot.lane.b32.xlu0 %v1061, 126
        %v1065 = vpop.permute.xlu0 %1064
        %vm1066 = vcmp.lt.s32.totalorder %v350, 126
        %v1067 = vsel %vm1066, %v1063, %v1065
        %v1068 = vsel %vm1066, %v1065, %v1063
        %s1069 = scalar_lea.vmem [#allocation6], 20
        %v1070 = vld [vmem:[%s1069] ss:$8 sm:$0x3]
        %v1072 = vlaneseq
        %v1073 = vshrl.u32 %v1072, 7
        %v1074 = vsub.s32 0, %v1073
        %v1075 = vrot.slane %v1070, %v1074
        %v1076 = vlaneseq
        %v1077 = vshrl.u32 %v1076, 7
        %v1078 = vsub.s32 1, %v1077
        %v1079 = vrot.slane %v1070, %v1078
        %v1082 = vmul.f32 %v1067, %v1075
        %v1083 = vmul.f32 %v1068, %v1079
        %v1084 = vadd.f32 %v992, %v1082
        %v1085 = vadd.f32 %v993, %v1083
        %v1086 = vstv %s253
        %v1087 = vmul.f32 %v1086, %v372
        %v1088 = vmul.f32 %v1086, %v373
        %v1089 = vstv %s302
        %v1090 = vmul.f32 %v1089, %v374
        %v1091 = vmul.f32 %v1089, %v375
        %v1092 = vadd.f32 %v1087, %v1090
        %v1093 = vadd.f32 %v1088, %v1091
        %v1094 = vstv %s260
        %v1095 = vmul.f32 %v1094, %v402
        %v1096 = vmul.f32 %v1094, %v403
        %v1097 = vadd.f32 %v1092, %v1095
        %v1098 = vadd.f32 %v1093, %v1096
        %v1099 = vstv %s309
        %v1100 = vmul.f32 %v1099, %v404
        %v1101 = vmul.f32 %v1099, %v405
        %v1102 = vadd.f32 %v1097, %v1100
        %v1103 = vadd.f32 %v1098, %v1101
        %v1104 = vstv %s267
        %v1105 = vmul.f32 %v1104, %v432
        %v1106 = vmul.f32 %v1104, %v433
        %v1107 = vadd.f32 %v1102, %v1105
        %v1108 = vadd.f32 %v1103, %v1106
        %v1109 = vstv %s316
        %v1110 = vmul.f32 %v1109, %v434
        %v1111 = vmul.f32 %v1109, %v435
        %v1112 = vadd.f32 %v1107, %v1110
        %v1113 = vadd.f32 %v1108, %v1111
        %v1114 = vstv %s274
        %v1115 = vmul.f32 %v1114, %v449
        %v1116 = vmul.f32 %v1114, %v450
        %v1117 = vadd.f32 %v1112, %v1115
        %v1118 = vadd.f32 %v1113, %v1116
        %v1119 = vstv %s323
        %v1120 = vmul.f32 %v1119, %v451
        %v1121 = vmul.f32 %v1119, %v452
        %v1122 = vadd.f32 %v1117, %v1120
        %v1123 = vadd.f32 %v1118, %v1121
        %v1124 = vstv %s281
        %v1125 = vmul.f32 %v1124, %v479
        %v1126 = vmul.f32 %v1124, %v480
        %v1127 = vadd.f32 %v1122, %v1125
        %v1128 = vadd.f32 %v1123, %v1126
        %v1129 = vstv %s330
        %v1130 = vmul.f32 %v1129, %v481
        %v1131 = vmul.f32 %v1129, %v482
        %v1132 = vadd.f32 %v1127, %v1130
        %v1133 = vadd.f32 %v1128, %v1131
        %v1134 = vstv %s288
        %v1135 = vmul.f32 %v1134, %v509
        %v1136 = vmul.f32 %v1134, %v510
        %v1137 = vadd.f32 %v1132, %v1135
        %v1138 = vadd.f32 %v1133, %v1136
        %v1139 = vstv %s337
        %v1140 = vmul.f32 %v1139, %v511
        %v1141 = vmul.f32 %v1139, %v512
        %v1142 = vadd.f32 %v1137, %v1140
        %v1143 = vadd.f32 %v1138, %v1141
        %v1144 = vstv %s295
        %v1145 = vmul.f32 %v1144, %v539
        %v1146 = vmul.f32 %v1144, %v540
        %v1147 = vadd.f32 %v1142, %v1145
        %v1148 = vadd.f32 %v1143, %v1146
        %v1149 = vstv %s344
        %v1150 = vmul.f32 %v1149, %v541
        %v1151 = vmul.f32 %v1149, %v542
        %v1152 = vadd.f32 %v1147, %v1150
        %v1153 = vadd.f32 %v1148, %v1151
        %1154 = vrot.lane.b32.xlu0 %v1152, 125
        %v1155 = vpop.permute.xlu0 %1154
        %1156 = vrot.lane.b32.xlu0 %v1153, 125
        %v1157 = vpop.permute.xlu0 %1156
        %vm1158 = vcmp.lt.s32.totalorder %v350, 125
        %v1159 = vsel %vm1158, %v1155, %v1157
        %v1160 = vsel %vm1158, %v1157, %v1155
        %s1161 = scalar_lea.vmem [#allocation6], 21
        %v1162 = vld [vmem:[%s1161] ss:$8 sm:$0x3]
        %v1164 = vlaneseq
        %v1165 = vshrl.u32 %v1164, 7
        %v1166 = vsub.s32 0, %v1165
        %v1167 = vrot.slane %v1162, %v1166
        %v1168 = vlaneseq
        %v1169 = vshrl.u32 %v1168, 7
        %v1170 = vsub.s32 1, %v1169
        %v1171 = vrot.slane %v1162, %v1170
        %v1174 = vmul.f32 %v1159, %v1167
        %v1175 = vmul.f32 %v1160, %v1171
        %v1176 = vadd.f32 %v1084, %v1174
        %v1177 = vadd.f32 %v1085, %v1175
        %v1178 = vxor.u32 %v1176, 2147483648
        %v1179 = vxor.u32 %v1177, 2147483648
        %v1180 = vmul.f32 %v1178, 1.442695
        %v1181 = vpow.pop %v1180
        %v1182 = vmul.f32 %v1179, 1.442695
        %v1183 = vpow.pop %v1182
        %v1184 = vadd.f32 %v1181, 1.0
        %v1185 = vadd.f32 %v1183, 1.0
        %v1186 = vrcp.pop %v1184
        %v1187 = vmul.f32 1.0, %v1186
        %v1188 = vrcp.pop %v1185
        %v1189 = vmul.f32 1.0, %v1188
        %v1190 = vlaneseq
        %v1191 = vshrl.u32 %v1190, 7
        %v1192 = vsub.s32 0, %v1191
        %v1193 = vrot.slane %v1187, %v1192
        %v1194 = vlaneseq
        %v1195 = vshrl.u32 %v1194, 7
        %v1196 = vsub.s32 0, %v1195
        %v1197 = vrot.slane %v1189, %v1196
        %v1200 = vcombine.low %v1193, %v1197
        %v1202 = vmul.f32 %v214, %v1200
        %1203 = vst [vmem:[%s213] sm:$0xff] %v1202
        %s1204 = sand.u32 %s98, 1
        %s1205 = scalar_lea.sflag [#allocation4], %s1204
        %s1206 = sand.u32 %s98, 1
        %s1207 = smul.addr %s1206, 8
        %s1208 = scalar_lea.vmem [#allocation9], %s1207
        // Predicated region
        $region45: #{tpu_custom_call.1} parent=31 // pred_check
          %p1209 = pneg %p108
        $region46: #{tpu_custom_call.1} parent=31 // pred_check_branch
          %1211 = sbr.rel (%p1209) target = $region48
        $region47: #{tpu_custom_call.1} parent=31 // pred_region
          %s1213 = ssub.s32 128, 128
          %1214 = vsyncadd %s1205, %s1213
          %s1215 = smul.addr %s22, 2
          %s1216 = smul.addr %s1215, 64
          %s1217 = scalar_lea.hbm %s3, %s1216
          %s1219 = sshll.u32 %s1208, 4
          %s1220 = int_to_ptr.vmem [resolvable:$true] %s1219
          %1222 = dma.vmem_to_hbm [thread:$0]  %s1220, 128, %s1217, %s1205
        $region48: #{tpu_custom_call.1} parent=31 // pred_fallthru
          _
      $region32: #{tpu_custom_call.1} parent=5 // pred_fallthru
        _
      %p1223 = scmp.le.s32.totalorder 2, %s17
      // Predicated region
      $region49: #{tpu_custom_call.1} parent=5 // pred_check
        %p1224 = pneg %p1223
      $region50: #{tpu_custom_call.1} parent=5 // pred_check_branch
        %1226 = sbr.rel (%p1224) target = $region52
      $region51: #{tpu_custom_call.1} parent=5 // pred_region
        %s1227 = ssub.s32 %s17, 2
        // Predicated region
        $region53: #{tpu_custom_call.1} parent=51 // pred_check
          %p1228 = pneg %p114
        $region54: #{tpu_custom_call.1} parent=51 // pred_check_branch
          %1230 = sbr.rel (%p1228) target = $region56
        $region55: #{tpu_custom_call.1} parent=51 // pred_region
          %s1231 = sand.u32 %s99, 1
          %s1232 = scalar_lea.sflag [#allocation4], %s1231
          %s1233 = sand.u32 %s99, 1
          %s1234 = smul.addr %s1233, 8
          %s1235 = scalar_lea.vmem [#allocation9], %s1234
          %1236 = dma.done %s1232, 128
        $region56: #{tpu_custom_call.1} parent=51 // pred_fallthru
          _
      $region52: #{tpu_custom_call.1} parent=5 // pred_fallthru
        _
    $region6: #{tpu_custom_call.1} parent=1 // loop_footer
      %s21 = sadd.s32 1, %s17
    $region7: #{tpu_custom_call.1} parent=1 // loop_footer_branch
      %16 = sbr.rel target = $region3
    $region8: #{tpu_custom_call.1} parent=1 // loop_exit
      _
    %1237 = vsyncpa [#allocation3], 1
    %s1238 = scalar_lea.sflag [#allocation3], 1
    %1239 = vsyncpa %s1238, 1
    %1240 = vsyncpa [#allocation8], 1
    %s1241 = scalar_lea.sflag [#allocation8], 1
    %1242 = vsyncpa %s1241, 1
    %1243 = vsyncpa [#allocation4], 1
    %s1244 = scalar_lea.sflag [#allocation4], 1
    %1245 = vsyncpa %s1244, 1
    %1246 = vsyncpa [#allocation5], 1
    %s1247 = scalar_lea.sflag [#allocation5], 1
    %1248 = vsyncpa %s1247, 1

</llo_original>
